<compile_context>
chip_gen: v7x
topology: tpu7x:2x2x1
jax: 0.10.0
libtpu: 0.0.40
codegen_flags: <defaults>
</compile_context>

<pallas_src>
import functools

import numpy as np
import jax
import jax.numpy as jnp
from jax import lax
from jax.experimental import pallas as pl
from jax.experimental.pallas import tpu as pltpu

NUM_HEADING_BIN = 12
NUM_SIZE_CLUSTER = 6

OUT_LANES = 128
OUT_SUBLANES = 8

# ---- small-tensor slab layout (f32, 8-lane-aligned group starts, 2 lane-tiles) ----
C_HS     = 0      # (12) heading_scores
C_HRN    = 16     # (12) heading_residual_normalized
C_HR     = 32     # (12) heading_residual
C_SS     = 48     # (6)  size_scores
C_SRN    = 56     # coord c at C_SRN  + 8*c (6 lanes each)
C_SR     = 80     # coord c at C_SR   + 8*c
C_ANCH   = 104    # coord c at C_ANCH + 8*c (anchors broadcast per row)
C_CENTER = 128    # (3) center
C_CLABEL = 136    # (3) center_label
C_S1C    = 144    # (3) stage1_center
C_HCL    = 152    # (1) heading_class_label (as f32)
C_HRL    = 153    # (1) heading_residual_label
C_SCL    = 154    # (1) size_class_label (as f32)
C_SRL    = 156    # (3) size_residual_label
SLAB_COLS = 160

# ---- output row lane layout ----
L_TOTAL_BOX = 0   # box_loss_weight * (all box losses)   (total minus mask loss)
L_CENTER    = 1   # box * center_loss            ('mask_loss' dict-key quirk)
L_HCLS      = 2
L_SCLS      = 3
L_HRN       = 4
L_SRN       = 5
L_S1C_QUIRK = 6   # 'stage1_center_loss' quirk: srn_loss * 20
L_CORNER    = 7
L_SEGSUM    = 8   # per-core partial SUM of per-point seg losses (not yet a mean)


def _mean_all(x):
    return jnp.mean(x, keepdims=True)            # (1, 1)


def _huber(err2d, delta):
    abs_e = jnp.abs(err2d)
    quad = jnp.minimum(abs_e, delta)             # torch.clamp(abs_error, max=delta)
    lin = abs_e - quad
    return _mean_all(0.5 * quad * quad + delta * lin)


def _log_softmax_rows(x):
    m = jnp.max(x, axis=1, keepdims=True)
    lse = m + jnp.log(jnp.sum(jnp.exp(x - m), axis=1, keepdims=True))
    return x - lse


def _corners_xyz(cx, cy, cz, heading, l, w, h):
    """centers/heading/sizes as (bs,1) each -> corner coords (bs,8) x/y/z."""
    idx = lax.broadcasted_iota(jnp.int32, (1, 8), 1)
    m4 = idx % 4
    xs = jnp.where(m4 < 2, 1.0, -1.0).astype(jnp.float32)                  # + + - - + + - -
    ys = jnp.where(idx < 4, 1.0, -1.0).astype(jnp.float32)                 # + + + + - - - -
    zs = jnp.where((m4 == 0) | (m4 == 3), 1.0, -1.0).astype(jnp.float32)   # + - - + + - - +
    xc = (l * 0.5) * xs
    yc = (h * 0.5) * ys
    zc = (w * 0.5) * zs
    c = jnp.cos(heading)
    s = jnp.sin(heading)
    X = c * xc + s * zc + cx
    Y = yc + cy
    Z = (-s) * xc + c * zc + cz
    return X, Y, Z


def _loss_kernel(slab_ref, z_ref, lbl_ref, out_ref, acc_ref, *,
                 npts, nt_inner, tn, corner_loss_weight, box_loss_weight):
    f32 = jnp.float32
    p = pl.program_id(0)
    i = pl.program_id(1)

    @pl.when(i == 0)
    def _init():
        acc_ref[...] = jnp.zeros_like(acc_ref)

    # ---------------- 1. segmentation loss partial sum (BCE with logits) -----
    z = z_ref[...]                                           # (bs, tn) f32
    lbl = lbl_ref[...]                                       # (bs, tn) int32
    lane = lax.broadcasted_iota(jnp.int32, z.shape, 1)
    gidx = (p * nt_inner + i) * tn + lane                    # global point index
    valid = gidx < npts
    zm = jnp.where(valid, z, 0.0)                            # mask BEFORE transcendentals
    t = jnp.where(lbl == 1, 1.0, 0.0).astype(f32)
    per_pt = jnp.maximum(zm, 0.0) - zm * t + jnp.log(1.0 + jnp.exp(-jnp.abs(zm)))
    per_pt = jnp.where(valid, per_pt, 0.0)
    acc_ref[...] += jnp.sum(per_pt, keepdims=True)           # (1, 1)
    # TODO(synk): on v6e/v7x the exp/log above could run in bf16 (f32 accumulate)
    # for ~2x EUP throughput if the training-loss tolerance allows; keep f32 on v5e.

    last = i == nt_inner - 1

    # ---------------- partial-sum-only row for the non-primary core ----------
    @pl.when(jnp.logical_and(last, p != 0))
    def _emit_partial():
        lane_o = lax.broadcasted_iota(jnp.int32, (1, OUT_SUBLANES, OUT_LANES), 2)
        out_ref[...] = jnp.where(lane_o == L_SEGSUM, acc_ref[...], 0.0).astype(f32)

    # ---------------- full slab losses + row emit on core p == 0 -------------
    @pl.when(jnp.logical_and(last, p == 0))
    def _emit_full():
        slab = slab_ref[...]                                 # (bs, SLAB_COLS)
        bs = slab.shape[0]

        def col(start, size):
            return slab[:, start:start + size]

        # ---- 2. center losses ----
        c = col(C_CENTER, 3)
        cl = col(C_CLABEL, 3)
        s1c = col(C_S1C, 3)

        def l2rows(a, b):
            d = a - b
            return jnp.sqrt(jnp.sum(d * d, axis=1, keepdims=True))   # (bs, 1)

        center_loss = _huber(l2rows(c, cl), 2.0)
        stage1_center_loss = _huber(l2rows(c, s1c), 1.0)

        # ---- 3. heading losses ----
        hs = col(C_HS, NUM_HEADING_BIN)
        h_logsm = _log_softmax_rows(hs)
        hcl = col(C_HCL, 1)
        hid = lax.broadcasted_iota(jnp.int32, (bs, NUM_HEADING_BIN), 1).astype(f32)
        hcls_onehot = (hid == hcl).astype(f32)
        heading_class_loss = -_mean_all(
            jnp.sum(h_logsm * hcls_onehot, axis=1, keepdims=True))

        hrn = col(C_HRN, NUM_HEADING_BIN)
        hrn_dist = jnp.sum(hrn * hcls_onehot, axis=1, keepdims=True)
        hrl = col(C_HRL, 1)
        heading_residual_normalized_loss = _huber(
            hrn_dist - hrl / (np.pi / NUM_HEADING_BIN), 1.0)

        # ---- 4. size losses (+ box params for corner loss) ----
        ss = col(C_SS, NUM_SIZE_CLUSTER)
        s_logsm = _log_softmax_rows(ss)
        scl = col(C_SCL, 1)
        sid = lax.broadcasted_iota(jnp.int32, (bs, NUM_SIZE_CLUSTER), 1).astype(f32)
        scls_onehot = (sid == scl).astype(f32)
        size_class_loss = -_mean_all(
            jnp.sum(s_logsm * scls_onehot, axis=1, keepdims=True))

        srl = col(C_SRL, 3)
        sq = 0.0
        size_pred = []
        size_label = []
        for cidx in range(3):
            srn_c = col(C_SRN + 8 * cidx, NUM_SIZE_CLUSTER)
            sr_c = col(C_SR + 8 * cidx, NUM_SIZE_CLUSTER)
            anc_c = col(C_ANCH + 8 * cidx, NUM_SIZE_CLUSTER)
            srl_c = srl[:, cidx:cidx + 1]

            pred_c = jnp.sum(srn_c * scls_onehot, axis=1, keepdims=True)
            mean_size_c = jnp.sum(anc_c * scls_onehot, axis=1, keepdims=True)
            sr_sel_c = jnp.sum(sr_c * scls_onehot, axis=1, keepdims=True)

            d = srl_c / mean_size_c - pred_c   # precondition: valid size label
            sq = sq + d * d
            # reference quirk: mean_sizes = anchors + size_residual,
            #                  sizes = mean_sizes + size_residual
            size_pred.append(mean_size_c + 2.0 * sr_sel_c)
            size_label.append(mean_size_c + srl_c)

        size_residual_normalized_loss = _huber(jnp.sqrt(sq), 1.0)

        # ---- 5. corner loss ----
        binc = lax.broadcasted_iota(jnp.int32, (1, NUM_HEADING_BIN), 1).astype(f32) * (
            2.0 * np.pi / NUM_HEADING_BIN)
        hr = col(C_HR, NUM_HEADING_BIN)
        heading_pred = jnp.sum(hcls_onehot * (hr + binc), axis=1, keepdims=True)
        heading_label = jnp.sum(hcls_onehot * (hrl + binc), axis=1, keepdims=True)

        pX, pY, pZ = _corners_xyz(c[:, 0:1], c[:, 1:2], c[:, 2:3],
                                  heading_pred, size_pred[0], size_pred[1], size_pred[2])
        gX, gY, gZ = _corners_xyz(cl[:, 0:1], cl[:, 1:2], cl[:, 2:3],
                                  heading_label, size_label[0], size_label[1], size_label[2])
        # heading+pi flips cos/sin -> GT box mirrored through the label center
        fX = 2.0 * cl[:, 0:1] - gX
        fZ = 2.0 * cl[:, 2:3] - gZ

        dx, dy, dz = pX - gX, pY - gY, pZ - gZ
        d_gt = jnp.sqrt(dx * dx + dy * dy + dz * dz)
        ex, ez = pX - fX, pZ - fZ
        d_fl = jnp.sqrt(ex * ex + dy * dy + ez * ez)
        corners_loss = _huber(jnp.minimum(d_gt, d_fl), 1.0)

        # ---- 6. assemble and store the result row (single lane-dense store) ----
        box_total = box_loss_weight * (
            center_loss + heading_class_loss + size_class_loss
            + heading_residual_normalized_loss * 20.0
            + size_residual_normalized_loss * 20.0
            + stage1_center_loss
            + corner_loss_weight * corners_loss)

        vals = (
            (L_TOTAL_BOX, box_total),
            (L_CENTER, box_loss_weight * center_loss),
            (L_HCLS, box_loss_weight * heading_class_loss),
            (L_SCLS, box_loss_weight * size_class_loss),
            (L_HRN, box_loss_weight * heading_residual_normalized_loss * 20.0),
            (L_SRN, box_loss_weight * size_residual_normalized_loss * 20.0),
            (L_S1C_QUIRK, box_loss_weight * size_residual_normalized_loss * 20.0),
            (L_CORNER, box_loss_weight * corners_loss * corner_loss_weight),
            (L_SEGSUM, acc_ref[...]),
        )
        lane_o = lax.broadcasted_iota(jnp.int32, (1, OUT_SUBLANES, OUT_LANES), 2)
        row = jnp.zeros((1, OUT_SUBLANES, OUT_LANES), f32)
        for k, v in vals:
            row = jnp.where(lane_o == k, v, row)
        out_ref[...] = row


def frustum_pointnet_loss(logits, mask_label, center, center_label, stage1_center,
                          heading_scores, heading_residual_normalized, heading_residual,
                          heading_class_label, heading_residual_label,
                          size_scores, size_residual_normalized, size_residual,
                          size_class_label, size_residual_label, hierarchy_anchors,
                          corner_loss_weight=10.0, box_loss_weight=1.0):
    f32 = jnp.float32
    bs, npts = logits.shape[0], logits.shape[1]

    # --- npts-scaling operands: NO pack / transpose through HBM.
    # A single elementwise fusion produces z = logit(cls1) - logit(cls0), which is
    # all the BCE-with-logits form needs; the raw int32 mask goes straight in.
    z = (logits[..., 1] - logits[..., 0]).astype(f32)        # (bs, npts)
    lbl = mask_label.astype(jnp.int32)                       # (bs, npts)

    # --- tiny per-batch tensors: one (bs, SLAB_COLS) f32 slab (single operand DMA).
    slab = jnp.zeros((bs, SLAB_COLS), f32)

    def put(s, start, piece):
        piece = piece.astype(f32)
        return s.at[:, start:start + piece.shape[1]].set(piece)

    slab = put(slab, C_HS, heading_scores)
    slab = put(slab, C_HRN, heading_residual_normalized)
    slab = put(slab, C_HR, heading_residual)
    slab = put(slab, C_SS, size_scores)
    for cidx in range(3):
        slab = put(slab, C_SRN + 8 * cidx, size_residual_normalized[:, :, cidx])
        slab = put(slab, C_SR + 8 * cidx, size_residual[:, :, cidx])
        slab = put(slab, C_ANCH + 8 * cidx,
                   jnp.broadcast_to(hierarchy_anchors[:, cidx][None, :],
                                    (bs, NUM_SIZE_CLUSTER)))
    slab = put(slab, C_CENTER, center)
    slab = put(slab, C_CLABEL, center_label)
    slab = put(slab, C_S1C, stage1_center)
    slab = put(slab, C_HCL, heading_class_label.reshape(bs, 1))
    slab = put(slab, C_HRL, heading_residual_label.reshape(bs, 1))
    slab = put(slab, C_SCL, size_class_label.reshape(bs, 1))
    slab = put(slab, C_SRL, size_residual_label)

    # --- grid: point tiles ("arbitrary") x 2-way split ("parallel" -> v7x megacore).
    tn = npts if npts <= 512 else 512                        # lane-dense, (8,128)-legal
    nt_total = pl.cdiv(npts, tn)
    nsplit = 2 if nt_total >= 2 else 1
    nt_inner = pl.cdiv(nt_total, nsplit)

    def pts_map(p, i):
        # clamp so a trailing fully-out-of-range tile re-reads the last valid block
        # (its contribution is masked to zero in-kernel via the global point index)
        return (0, jnp.minimum(p * nt_inner + i, nt_total - 1))

    kernel = functools.partial(_loss_kernel, npts=npts, nt_inner=nt_inner, tn=tn,
                               corner_loss_weight=float(corner_loss_weight),
                               box_loss_weight=float(box_loss_weight))

    cost = pl.CostEstimate(
        flops=int(bs * npts * 10 + bs * 2000),
        transcendentals=int(bs * npts * 2 + bs * 80),
        bytes_accessed=int(4 * (z.size + lbl.size + slab.size
                                + nsplit * OUT_SUBLANES * OUT_LANES)))

    out = pl.pallas_call(
        kernel,
        out_shape=jax.ShapeDtypeStruct((nsplit, OUT_SUBLANES, OUT_LANES), f32),
        grid_spec=pltpu.PrefetchScalarGridSpec(
            num_scalar_prefetch=0,
            grid=(nsplit, nt_inner),
            in_specs=[
                pl.BlockSpec((bs, SLAB_COLS), lambda p, i: (0, 0)),   # resident slab
                pl.BlockSpec((bs, tn), pts_map),                      # z tiles
                pl.BlockSpec((bs, tn), pts_map),                      # mask tiles
            ],
            out_specs=pl.BlockSpec((1, OUT_SUBLANES, OUT_LANES), lambda p, i: (p, 0, 0)),
            scratch_shapes=[pltpu.VMEM((1, 1), f32)]),
        compiler_params=pltpu.CompilerParams(
            dimension_semantics=("parallel", "arbitrary")),
        cost_estimate=cost,
    )(slab, z, lbl)

    # --- combine per-core seg partial sums + assemble the loss dict (scalar ops).
    rows = out[:, 0, :]                                      # (nsplit, OUT_LANES)
    mask_loss = jnp.sum(rows[:, L_SEGSUM]) / (bs * npts)     # true mean NLL / BCE
    row0 = rows[0]
    losses = {
        'total_loss': row0[L_TOTAL_BOX] + mask_loss,
        'mask_loss': row0[L_CENTER],          # reference dict quirk: duplicate key -> box*center_loss
        'heading_class_loss': row0[L_HCLS],
        'size_class_loss': row0[L_SCLS],
        'heading_residual_normalized_loss': row0[L_HRN],
        'size_residual_normalized_loss': row0[L_SRN],
        'stage1_center_loss': row0[L_S1C_QUIRK],   # reference quirk: holds srn_loss * 20
        'corners_loss': row0[L_CORNER],
    }
    return losses


if __name__ == "__main__":
    key = jax.random.PRNGKey(0)
    bs, npts = 4, 128
    ks = jax.random.split(key, 16)

    logits = jax.random.normal(ks[0], (bs, npts, 2), jnp.float32)
    mask_label = jax.random.randint(ks[1], (bs, npts), 0, 2, jnp.int32)
    center = jax.random.normal(ks[2], (bs, 3), jnp.float32)
    center_label = center + 0.1 * jax.random.normal(ks[3], (bs, 3), jnp.float32)
    stage1_center = center + 0.1 * jax.random.normal(ks[4], (bs, 3), jnp.float32)
    heading_scores = jax.random.normal(ks[5], (bs, NUM_HEADING_BIN), jnp.float32)
    heading_residual_normalized = 0.1 * jax.random.normal(
        ks[6], (bs, NUM_HEADING_BIN), jnp.float32)
    heading_residual = heading_residual_normalized * (np.pi / NUM_HEADING_BIN)
    heading_class_label = jax.random.randint(ks[7], (bs,), 0, NUM_HEADING_BIN, jnp.int32)
    heading_residual_label = 0.1 * jax.random.normal(ks[8], (bs,), jnp.float32)
    size_scores = jax.random.normal(ks[9], (bs, NUM_SIZE_CLUSTER), jnp.float32)
    size_residual_normalized = 0.1 * jax.random.normal(
        ks[10], (bs, NUM_SIZE_CLUSTER, 3), jnp.float32)
    hierarchy_anchors = jnp.abs(
        jax.random.normal(ks[11], (NUM_SIZE_CLUSTER, 3), jnp.float32)) + 1.0
    size_residual = size_residual_normalized * hierarchy_anchors[None, :, :]
    size_class_label = jax.random.randint(ks[12], (bs,), 0, NUM_SIZE_CLUSTER, jnp.int32)
    size_residual_label = 0.1 * jax.random.normal(ks[13], (bs, 3), jnp.float32)

    losses = frustum_pointnet_loss(
        logits, mask_label, center, center_label, stage1_center,
        heading_scores, heading_residual_normalized, heading_residual,
        heading_class_label, heading_residual_label,
        size_scores, size_residual_normalized, size_residual,
        size_class_label, size_residual_label, hierarchy_anchors,
        corner_loss_weight=10.0, box_loss_weight=1.0)

    jax.block_until_ready(losses["total_loss"])
    print("KERNEL_OK")
</pallas_src>

<mosaic_0001>
module attributes {stable_mosaic.version = 11 : i64} {
  func.func @_loss_kernel(%arg0: i32, %arg1: i32, %arg2: memref<4x160xf32, #tpu.memory_space<vmem>>, %arg3: memref<4x128xf32, #tpu.memory_space<vmem>>, %arg4: memref<4x128xi32, #tpu.memory_space<vmem>>, %arg5: memref<1x8x128xf32, #tpu.memory_space<vmem>>, %arg6: memref<1x1xf32, #tpu.memory_space<vmem>>) attributes {dimension_semantics = [#tpu.dimension_semantics<parallel>, #tpu.dimension_semantics<arbitrary>], iteration_bounds = array<i64: 1, 1>, scalar_prefetch = 0 : i64, scratch_operands = 1 : i64, tpu.core_type = #tpu.core_type<tc>, window_params = [{pipeline_mode = #tpu.pipeline_mode<synchronous>, transform_indices = @transform_0, window_bounds = array<i64: 4, 160>}, {transform_indices = @transform_1, window_bounds = array<i64: 4, 128>}, {transform_indices = @transform_2, window_bounds = array<i64: 4, 128>}, {transform_indices = @transform_3, window_bounds = array<i64: 1, 8, 128>}]} {
    %c0_i32 = arith.constant 0 : i32
    %0 = arith.cmpi eq, %arg1, %c0_i32 : i32
    %1 = arith.extui %0 : i1 to i32
    %c0_i32_0 = arith.constant 0 : i32
    %2 = arith.cmpi ne, %1, %c0_i32_0 : i32
    scf.if %2 {
      %cst_22 = arith.constant 0.000000e+00 : f32
      %51 = vector.broadcast %cst_22 : f32 to vector<1x1xf32>
      %c0_23 = arith.constant 0 : index
      %c0_24 = arith.constant 0 : index
      %52 = vector.load %arg6[%c0_23, %c0_24] : memref<1x1xf32, #tpu.memory_space<vmem>>, vector<1x1xf32>
      tpu.vector_store %arg6[%c0_23, %c0_24], %51 {strides = array<i32>} : memref<1x1xf32, #tpu.memory_space<vmem>>, vector<1x1xf32>,
    } else {
    }
    %c0 = arith.constant 0 : index
    %c0_1 = arith.constant 0 : index
    %3 = vector.load %arg3[%c0, %c0_1] : memref<4x128xf32, #tpu.memory_space<vmem>>, vector<4x128xf32>
    %c0_2 = arith.constant 0 : index
    %c0_3 = arith.constant 0 : index
    %4 = vector.load %arg4[%c0_2, %c0_3] : memref<4x128xi32, #tpu.memory_space<vmem>>, vector<4x128xi32>
    %5 = tpu.iota {dimensions = array<i32: 1>} : vector<4x128xi32>
    %c1_i32 = arith.constant 1 : i32
    %6 = arith.muli %arg0, %c1_i32 : i32
    %7 = arith.addi %6, %arg1 : i32
    %c128_i32 = arith.constant 128 : i32
    %8 = arith.muli %7, %c128_i32 : i32
    %9 = vector.broadcast %8 : i32 to vector<4x128xi32>
    %10 = arith.addi %9, %5 : vector<4x128xi32>
    %c128_i32_4 = arith.constant 128 : i32
    %11 = vector.broadcast %c128_i32_4 : i32 to vector<4x128xi32>
    %12 = arith.cmpi slt, %10, %11 : vector<4x128xi32>
    %cst = arith.constant 0.000000e+00 : f32
    %13 = vector.broadcast %cst : f32 to vector<4x128xf32>
    %14 = arith.select %12, %3, %13 : vector<4x128xi1>, vector<4x128xf32>
    %c1_i32_5 = arith.constant 1 : i32
    %15 = vector.broadcast %c1_i32_5 : i32 to vector<4x128xi32>
    %16 = arith.cmpi eq, %4, %15 : vector<4x128xi32>
    %cst_6 = arith.constant 1.000000e+00 : f32
    %cst_7 = arith.constant 0.000000e+00 : f32
    %17 = vector.broadcast %cst_6 : f32 to vector<4x128xf32>
    %18 = vector.broadcast %cst_7 : f32 to vector<4x128xf32>
    %19 = arith.select %16, %17, %18 : vector<4x128xi1>, vector<4x128xf32>
    %cst_8 = arith.constant 0.000000e+00 : f32
    %20 = vector.broadcast %cst_8 : f32 to vector<4x128xf32>
    %21 = arith.maximumf %14, %20 : vector<4x128xf32>
    %22 = arith.mulf %14, %19 : vector<4x128xf32>
    %23 = arith.subf %21, %22 : vector<4x128xf32>
    %24 = math.absf %14 : vector<4x128xf32>
    %cst_9 = arith.constant 0.000000e+00 : f32
    %25 = vector.broadcast %cst_9 : f32 to vector<4x128xf32>
    %26 = arith.subf %25, %24 : vector<4x128xf32>
    %27 = math.exp %26 : vector<4x128xf32>
    %cst_10 = arith.constant 1.000000e+00 : f32
    %28 = vector.broadcast %cst_10 : f32 to vector<4x128xf32>
    %29 = arith.addf %28, %27 : vector<4x128xf32>
    %30 = math.log %29 : vector<4x128xf32>
    %31 = arith.addf %23, %30 : vector<4x128xf32>
    %cst_11 = arith.constant 0.000000e+00 : f32
    %32 = vector.broadcast %cst_11 : f32 to vector<4x128xf32>
    %33 = arith.select %12, %31, %32 : vector<4x128xi1>, vector<4x128xf32>
    %c0_12 = arith.constant 0 : index
    %c0_13 = arith.constant 0 : index
    %34 = vector.load %arg6[%c0_12, %c0_13] : memref<1x1xf32, #tpu.memory_space<vmem>>, vector<1x1xf32>
    %35 = vector.shape_cast %33 : vector<4x128xf32> to vector<1x4x128xf32>
    %cst_14 = arith.constant dense<0.000000e+00> : vector<1xf32>
    %36 = vector.multi_reduction <add>, %35, %cst_14 [1, 2] : vector<1x4x128xf32> to vector<1xf32>
    %37 = vector.shape_cast %36 : vector<1xf32> to vector<1x1x1xf32>
    %38 = vector.extract %37[0, 0, 0] : f32 from vector<1x1x1xf32>
    %39 = vector.broadcast %38 : f32 to vector<1x1xf32>
    %40 = arith.addf %34, %39 : vector<1x1xf32>
    %c0_15 = arith.constant 0 : index
    %c0_16 = arith.constant 0 : index
    %41 = vector.load %arg6[%c0_15, %c0_16] : memref<1x1xf32, #tpu.memory_space<vmem>>, vector<1x1xf32>
    tpu.vector_store %arg6[%c0_15, %c0_16], %40 {strides = array<i32>} : memref<1x1xf32, #tpu.memory_space<vmem>>, vector<1x1xf32>,
    %c0_i32_17 = arith.constant 0 : i32
    %42 = arith.cmpi eq, %arg1, %c0_i32_17 : i32
    %c0_i32_18 = arith.constant 0 : i32
    %43 = arith.cmpi ne, %arg0, %c0_i32_18 : i32
    %44 = arith.andi %42, %43 : i1
    %45 = arith.extui %44 : i1 to i32
    %c0_i32_19 = arith.constant 0 : i32
    %46 = arith.cmpi ne, %45, %c0_i32_19 : i32
    scf.if %46 {
      %51 = tpu.iota {dimensions = array<i32: 2>} : vector<1x8x128xi32>
      %c8_i32 = arith.constant 8 : i32
      %52 = vector.broadcast %c8_i32 : i32 to vector<1x8x128xi32>
      %53 = arith.cmpi eq, %51, %52 : vector<1x8x128xi32>
      %c0_22 = arith.constant 0 : index
      %c0_23 = arith.constant 0 : index
      %54 = vector.load %arg6[%c0_22, %c0_23] : memref<1x1xf32, #tpu.memory_space<vmem>>, vector<1x1xf32>
      %cst_24 = arith.constant 0.000000e+00 : f32
      %55 = vector.shape_cast %54 : vector<1x1xf32> to vector<1x1x1xf32>
      %56 = vector.broadcast %55 : vector<1x1x1xf32> to vector<1x8x128xf32>
      %57 = vector.broadcast %cst_24 : f32 to vector<1x8x128xf32>
      %58 = arith.select %53, %56, %57 : vector<1x8x128xi1>, vector<1x8x128xf32>
      %c0_25 = arith.constant 0 : index
      %c0_26 = arith.constant 0 : index
      %c0_27 = arith.constant 0 : index
      %59 = vector.load %arg5[%c0_25, %c0_26, %c0_27] : memref<1x8x128xf32, #tpu.memory_space<vmem>>, vector<1x8x128xf32>
      tpu.vector_store %arg5[%c0_25, %c0_26, %c0_27], %58 {strides = array<i32>} : memref<1x8x128xf32, #tpu.memory_space<vmem>>, vector<1x8x128xf32>,
    } else {
    }
    %c0_i32_20 = arith.constant 0 : i32
    %47 = arith.cmpi eq, %arg0, %c0_i32_20 : i32
    %48 = arith.andi %42, %47 : i1
    %49 = arith.extui %48 : i1 to i32
    %c0_i32_21 = arith.constant 0 : i32
    %50 = arith.cmpi ne, %49, %c0_i32_21 : i32
    scf.if %50 {
      %c0_22 = arith.constant 0 : index
      %c0_23 = arith.constant 0 : index
      %51 = vector.load %arg2[%c0_22, %c0_23] : memref<4x160xf32, #tpu.memory_space<vmem>>, vector<4x160xf32>
      %52 = vector.extract_strided_slice %51 {offsets = [0, 128], sizes = [4, 3], strides = [1, 1]} : vector<4x160xf32> to vector<4x3xf32>
      %53 = vector.extract_strided_slice %51 {offsets = [0, 136], sizes = [4, 3], strides = [1, 1]} : vector<4x160xf32> to vector<4x3xf32>
      %54 = vector.extract_strided_slice %51 {offsets = [0, 144], sizes = [4, 3], strides = [1, 1]} : vector<4x160xf32> to vector<4x3xf32>
      %55 = arith.subf %52, %53 : vector<4x3xf32>
      %56 = arith.mulf %55, %55 : vector<4x3xf32>
      %cst_24 = arith.constant dense<0.000000e+00> : vector<4xf32>
      %57 = vector.multi_reduction <add>, %56, %cst_24 [1] : vector<4x3xf32> to vector<4xf32>
      %58 = vector.shape_cast %57 : vector<4xf32> to vector<4x1xf32>
      %59 = math.sqrt %58 : vector<4x1xf32>
      %60 = math.absf %59 : vector<4x1xf32>
      %cst_25 = arith.constant 2.000000e+00 : f32
      %61 = vector.broadcast %cst_25 : f32 to vector<4x1xf32>
      %62 = arith.minimumf %60, %61 : vector<4x1xf32>
      %63 = arith.subf %60, %62 : vector<4x1xf32>
      %cst_26 = arith.constant 5.000000e-01 : f32
      %64 = vector.broadcast %cst_26 : f32 to vector<4x1xf32>
      %65 = arith.mulf %64, %62 : vector<4x1xf32>
      %66 = arith.mulf %65, %62 : vector<4x1xf32>
      %cst_27 = arith.constant 2.000000e+00 : f32
      %67 = vector.broadcast %cst_27 : f32 to vector<4x1xf32>
      %68 = arith.mulf %67, %63 : vector<4x1xf32>
      %69 = arith.addf %66, %68 : vector<4x1xf32>
      %70 = vector.shape_cast %69 : vector<4x1xf32> to vector<1x4x1xf32>
      %cst_28 = arith.constant dense<0.000000e+00> : vector<1xf32>
      %71 = vector.multi_reduction <add>, %70, %cst_28 [1, 2] : vector<1x4x1xf32> to vector<1xf32>
      %72 = vector.shape_cast %71 : vector<1xf32> to vector<1x1x1xf32>
      %73 = vector.extract %72[0, 0, 0] : f32 from vector<1x1x1xf32>
      %74 = vector.broadcast %73 : f32 to vector<1x1xf32>
      %cst_29 = arith.constant 4.000000e+00 : f32
      %75 = vector.broadcast %cst_29 : f32 to vector<1x1xf32>
      %76 = arith.divf %74, %75 : vector<1x1xf32>
      %77 = arith.subf %52, %54 : vector<4x3xf32>
      %78 = arith.mulf %77, %77 : vector<4x3xf32>
      %cst_30 = arith.constant dense<0.000000e+00> : vector<4xf32>
      %79 = vector.multi_reduction <add>, %78, %cst_30 [1] : vector<4x3xf32> to vector<4xf32>
      %80 = vector.shape_cast %79 : vector<4xf32> to vector<4x1xf32>
      %81 = math.sqrt %80 : vector<4x1xf32>
      %82 = math.absf %81 : vector<4x1xf32>
      %cst_31 = arith.constant 1.000000e+00 : f32
      %83 = vector.broadcast %cst_31 : f32 to vector<4x1xf32>
      %84 = arith.minimumf %82, %83 : vector<4x1xf32>
      %85 = arith.subf %82, %84 : vector<4x1xf32>
      %cst_32 = arith.constant 5.000000e-01 : f32
      %86 = vector.broadcast %cst_32 : f32 to vector<4x1xf32>
      %87 = arith.mulf %86, %84 : vector<4x1xf32>
      %88 = arith.mulf %87, %84 : vector<4x1xf32>
      %cst_33 = arith.constant 1.000000e+00 : f32
      %89 = vector.broadcast %cst_33 : f32 to vector<4x1xf32>
      %90 = arith.mulf %89, %85 : vector<4x1xf32>
      %91 = arith.addf %88, %90 : vector<4x1xf32>
      %92 = vector.shape_cast %91 : vector<4x1xf32> to vector<1x4x1xf32>
      %cst_34 = arith.constant dense<0.000000e+00> : vector<1xf32>
      %93 = vector.multi_reduction <add>, %92, %cst_34 [1, 2] : vector<1x4x1xf32> to vector<1xf32>
      %94 = vector.shape_cast %93 : vector<1xf32> to vector<1x1x1xf32>
      %95 = vector.extract %94[0, 0, 0] : f32 from vector<1x1x1xf32>
      %96 = vector.broadcast %95 : f32 to vector<1x1xf32>
      %cst_35 = arith.constant 4.000000e+00 : f32
      %97 = vector.broadcast %cst_35 : f32 to vector<1x1xf32>
      %98 = arith.divf %96, %97 : vector<1x1xf32>
      %99 = vector.extract_strided_slice %51 {offsets = [0, 0], sizes = [4, 12], strides = [1, 1]} : vector<4x160xf32> to vector<4x12xf32>
      %cst_36 = arith.constant dense<0xFF800000> : vector<4xf32>
      %100 = vector.multi_reduction <maximumf>, %99, %cst_36 [1] : vector<4x12xf32> to vector<4xf32>
      %101 = vector.shape_cast %100 : vector<4xf32> to vector<4x1xf32>
      %102 = vector.broadcast %101 : vector<4x1xf32> to vector<4x12xf32>
      %103 = arith.subf %99, %102 : vector<4x12xf32>
      %104 = math.exp %103 : vector<4x12xf32>
      %cst_37 = arith.constant dense<0.000000e+00> : vector<4xf32>
      %105 = vector.multi_reduction <add>, %104, %cst_37 [1] : vector<4x12xf32> to vector<4xf32>
      %106 = vector.shape_cast %105 : vector<4xf32> to vector<4x1xf32>
      %107 = math.log %106 : vector<4x1xf32>
      %108 = arith.addf %101, %107 : vector<4x1xf32>
      %109 = vector.broadcast %108 : vector<4x1xf32> to vector<4x12xf32>
      %110 = arith.subf %99, %109 : vector<4x12xf32>
      %111 = vector.extract_strided_slice %51 {offsets = [0, 152], sizes = [4, 1], strides = [1, 1]} : vector<4x160xf32> to vector<4x1xf32>
      %112 = tpu.iota {dimensions = array<i32: 1>} : vector<4x12xi32>
      %113 = arith.sitofp %112 : vector<4x12xi32> to vector<4x12xf32>
      %114 = vector.broadcast %111 : vector<4x1xf32> to vector<4x12xf32>
      %115 = arith.cmpf oeq, %113, %114 : vector<4x12xf32>
      %116 = arith.extui %115 : vector<4x12xi1> to vector<4x12xi32>
      %117 = arith.sitofp %116 : vector<4x12xi32> to vector<4x12xf32>
      %118 = arith.mulf %110, %117 : vector<4x12xf32>
      %cst_38 = arith.constant dense<0.000000e+00> : vector<4xf32>
      %119 = vector.multi_reduction <add>, %118, %cst_38 [1] : vector<4x12xf32> to vector<4xf32>
      %120 = vector.shape_cast %119 : vector<4xf32> to vector<4x1xf32>
      %121 = vector.shape_cast %120 : vector<4x1xf32> to vector<1x4x1xf32>
      %cst_39 = arith.constant dense<0.000000e+00> : vector<1xf32>
      %122 = vector.multi_reduction <add>, %121, %cst_39 [1, 2] : vector<1x4x1xf32> to vector<1xf32>
      %123 = vector.shape_cast %122 : vector<1xf32> to vector<1x1x1xf32>
      %124 = vector.extract %123[0, 0, 0] : f32 from vector<1x1x1xf32>
      %125 = vector.broadcast %124 : f32 to vector<1x1xf32>
      %cst_40 = arith.constant 4.000000e+00 : f32
      %126 = vector.broadcast %cst_40 : f32 to vector<1x1xf32>
      %127 = arith.divf %125, %126 : vector<1x1xf32>
      %cst_41 = arith.constant 0.000000e+00 : f32
      %128 = vector.broadcast %cst_41 : f32 to vector<1x1xf32>
      %129 = arith.subf %128, %127 : vector<1x1xf32>
      %130 = vector.extract_strided_slice %51 {offsets = [0, 16], sizes = [4, 12], strides = [1, 1]} : vector<4x160xf32> to vector<4x12xf32>
      %131 = arith.mulf %130, %117 : vector<4x12xf32>
      %cst_42 = arith.constant dense<0.000000e+00> : vector<4xf32>
      %132 = vector.multi_reduction <add>, %131, %cst_42 [1] : vector<4x12xf32> to vector<4xf32>
      %133 = vector.shape_cast %132 : vector<4xf32> to vector<4x1xf32>
      %134 = vector.extract_strided_slice %51 {offsets = [0, 153], sizes = [4, 1], strides = [1, 1]} : vector<4x160xf32> to vector<4x1xf32>
      %cst_43 = arith.constant 0.261799395 : f32
      %135 = vector.broadcast %cst_43 : f32 to vector<4x1xf32>
      %136 = arith.divf %134, %135 : vector<4x1xf32>
      %137 = arith.subf %133, %136 : vector<4x1xf32>
      %138 = math.absf %137 : vector<4x1xf32>
      %cst_44 = arith.constant 1.000000e+00 : f32
      %139 = vector.broadcast %cst_44 : f32 to vector<4x1xf32>
      %140 = arith.minimumf %138, %139 : vector<4x1xf32>
      %141 = arith.subf %138, %140 : vector<4x1xf32>
      %cst_45 = arith.constant 5.000000e-01 : f32
      %142 = vector.broadcast %cst_45 : f32 to vector<4x1xf32>
      %143 = arith.mulf %142, %140 : vector<4x1xf32>
      %144 = arith.mulf %143, %140 : vector<4x1xf32>
      %cst_46 = arith.constant 1.000000e+00 : f32
      %145 = vector.broadcast %cst_46 : f32 to vector<4x1xf32>
      %146 = arith.mulf %145, %141 : vector<4x1xf32>
      %147 = arith.addf %144, %146 : vector<4x1xf32>
      %148 = vector.shape_cast %147 : vector<4x1xf32> to vector<1x4x1xf32>
      %cst_47 = arith.constant dense<0.000000e+00> : vector<1xf32>
      %149 = vector.multi_reduction <add>, %148, %cst_47 [1, 2] : vector<1x4x1xf32> to vector<1xf32>
      %150 = vector.shape_cast %149 : vector<1xf32> to vector<1x1x1xf32>
      %151 = vector.extract %150[0, 0, 0] : f32 from vector<1x1x1xf32>
      %152 = vector.broadcast %151 : f32 to vector<1x1xf32>
      %cst_48 = arith.constant 4.000000e+00 : f32
      %153 = vector.broadcast %cst_48 : f32 to vector<1x1xf32>
      %154 = arith.divf %152, %153 : vector<1x1xf32>
      %155 = vector.extract_strided_slice %51 {offsets = [0, 48], sizes = [4, 6], strides = [1, 1]} : vector<4x160xf32> to vector<4x6xf32>
      %cst_49 = arith.constant dense<0xFF800000> : vector<4xf32>
      %156 = vector.multi_reduction <maximumf>, %155, %cst_49 [1] : vector<4x6xf32> to vector<4xf32>
      %157 = vector.shape_cast %156 : vector<4xf32> to vector<4x1xf32>
      %158 = vector.broadcast %157 : vector<4x1xf32> to vector<4x6xf32>
      %159 = arith.subf %155, %158 : vector<4x6xf32>
      %160 = math.exp %159 : vector<4x6xf32>
      %cst_50 = arith.constant dense<0.000000e+00> : vector<4xf32>
      %161 = vector.multi_reduction <add>, %160, %cst_50 [1] : vector<4x6xf32> to vector<4xf32>
      %162 = vector.shape_cast %161 : vector<4xf32> to vector<4x1xf32>
      %163 = math.log %162 : vector<4x1xf32>
      %164 = arith.addf %157, %163 : vector<4x1xf32>
      %165 = vector.broadcast %164 : vector<4x1xf32> to vector<4x6xf32>
      %166 = arith.subf %155, %165 : vector<4x6xf32>
      %167 = vector.extract_strided_slice %51 {offsets = [0, 154], sizes = [4, 1], strides = [1, 1]} : vector<4x160xf32> to vector<4x1xf32>
      %168 = tpu.iota {dimensions = array<i32: 1>} : vector<4x6xi32>
      %169 = arith.sitofp %168 : vector<4x6xi32> to vector<4x6xf32>
      %170 = vector.broadcast %167 : vector<4x1xf32> to vector<4x6xf32>
      %171 = arith.cmpf oeq, %169, %170 : vector<4x6xf32>
      %172 = arith.extui %171 : vector<4x6xi1> to vector<4x6xi32>
      %173 = arith.sitofp %172 : vector<4x6xi32> to vector<4x6xf32>
      %174 = arith.mulf %166, %173 : vector<4x6xf32>
      %cst_51 = arith.constant dense<0.000000e+00> : vector<4xf32>
      %175 = vector.multi_reduction <add>, %174, %cst_51 [1] : vector<4x6xf32> to vector<4xf32>
      %176 = vector.shape_cast %175 : vector<4xf32> to vector<4x1xf32>
      %177 = vector.shape_cast %176 : vector<4x1xf32> to vector<1x4x1xf32>
      %cst_52 = arith.constant dense<0.000000e+00> : vector<1xf32>
      %178 = vector.multi_reduction <add>, %177, %cst_52 [1, 2] : vector<1x4x1xf32> to vector<1xf32>
      %179 = vector.shape_cast %178 : vector<1xf32> to vector<1x1x1xf32>
      %180 = vector.extract %179[0, 0, 0] : f32 from vector<1x1x1xf32>
      %181 = vector.broadcast %180 : f32 to vector<1x1xf32>
      %cst_53 = arith.constant 4.000000e+00 : f32
      %182 = vector.broadcast %cst_53 : f32 to vector<1x1xf32>
      %183 = arith.divf %181, %182 : vector<1x1xf32>
      %cst_54 = arith.constant 0.000000e+00 : f32
      %184 = vector.broadcast %cst_54 : f32 to vector<1x1xf32>
      %185 = arith.subf %184, %183 : vector<1x1xf32>
      %186 = vector.extract_strided_slice %51 {offsets = [0, 156], sizes = [4, 3], strides = [1, 1]} : vector<4x160xf32> to vector<4x3xf32>
      %187 = vector.extract_strided_slice %51 {offsets = [0, 56], sizes = [4, 6], strides = [1, 1]} : vector<4x160xf32> to vector<4x6xf32>
      %188 = vector.extract_strided_slice %51 {offsets = [0, 80], sizes = [4, 6], strides = [1, 1]} : vector<4x160xf32> to vector<4x6xf32>
      %189 = vector.extract_strided_slice %51 {offsets = [0, 104], sizes = [4, 6], strides = [1, 1]} : vector<4x160xf32> to vector<4x6xf32>
      %190 = vector.extract_strided_slice %186 {offsets = [0, 0], sizes = [4, 1], strides = [1, 1]} : vector<4x3xf32> to vector<4x1xf32>
      %191 = arith.mulf %187, %173 : vector<4x6xf32>
      %cst_55 = arith.constant dense<0.000000e+00> : vector<4xf32>
      %192 = vector.multi_reduction <add>, %191, %cst_55 [1] : vector<4x6xf32> to vector<4xf32>
      %193 = vector.shape_cast %192 : vector<4xf32> to vector<4x1xf32>
      %194 = arith.mulf %189, %173 : vector<4x6xf32>
      %cst_56 = arith.constant dense<0.000000e+00> : vector<4xf32>
      %195 = vector.multi_reduction <add>, %194, %cst_56 [1] : vector<4x6xf32> to vector<4xf32>
      %196 = vector.shape_cast %195 : vector<4xf32> to vector<4x1xf32>
      %197 = arith.mulf %188, %173 : vector<4x6xf32>
      %cst_57 = arith.constant dense<0.000000e+00> : vector<4xf32>
      %198 = vector.multi_reduction <add>, %197, %cst_57 [1] : vector<4x6xf32> to vector<4xf32>
      %199 = vector.shape_cast %198 : vector<4xf32> to vector<4x1xf32>
      %200 = arith.divf %190, %196 : vector<4x1xf32>
      %201 = arith.subf %200, %193 : vector<4x1xf32>
      %202 = arith.mulf %201, %201 : vector<4x1xf32>
      %cst_58 = arith.constant 0.000000e+00 : f32
      %203 = vector.broadcast %cst_58 : f32 to vector<4x1xf32>
      %204 = arith.addf %203, %202 : vector<4x1xf32>
      %cst_59 = arith.constant 2.000000e+00 : f32
      %205 = vector.broadcast %cst_59 : f32 to vector<4x1xf32>
      %206 = arith.mulf %205, %199 : vector<4x1xf32>
      %207 = arith.addf %196, %206 : vector<4x1xf32>
      %208 = arith.addf %196, %190 : vector<4x1xf32>
      %209 = vector.extract_strided_slice %51 {offsets = [0, 64], sizes = [4, 6], strides = [1, 1]} : vector<4x160xf32> to vector<4x6xf32>
      %210 = vector.extract_strided_slice %51 {offsets = [0, 88], sizes = [4, 6], strides = [1, 1]} : vector<4x160xf32> to vector<4x6xf32>
      %211 = vector.extract_strided_slice %51 {offsets = [0, 112], sizes = [4, 6], strides = [1, 1]} : vector<4x160xf32> to vector<4x6xf32>
      %212 = vector.extract_strided_slice %186 {offsets = [0, 1], sizes = [4, 1], strides = [1, 1]} : vector<4x3xf32> to vector<4x1xf32>
      %213 = arith.mulf %209, %173 : vector<4x6xf32>
      %cst_60 = arith.constant dense<0.000000e+00> : vector<4xf32>
      %214 = vector.multi_reduction <add>, %213, %cst_60 [1] : vector<4x6xf32> to vector<4xf32>
      %215 = vector.shape_cast %214 : vector<4xf32> to vector<4x1xf32>
      %216 = arith.mulf %211, %173 : vector<4x6xf32>
      %cst_61 = arith.constant dense<0.000000e+00> : vector<4xf32>
      %217 = vector.multi_reduction <add>, %216, %cst_61 [1] : vector<4x6xf32> to vector<4xf32>
      %218 = vector.shape_cast %217 : vector<4xf32> to vector<4x1xf32>
      %219 = arith.mulf %210, %173 : vector<4x6xf32>
      %cst_62 = arith.constant dense<0.000000e+00> : vector<4xf32>
      %220 = vector.multi_reduction <add>, %219, %cst_62 [1] : vector<4x6xf32> to vector<4xf32>
      %221 = vector.shape_cast %220 : vector<4xf32> to vector<4x1xf32>
      %222 = arith.divf %212, %218 : vector<4x1xf32>
      %223 = arith.subf %222, %215 : vector<4x1xf32>
      %224 = arith.mulf %223, %223 : vector<4x1xf32>
      %225 = arith.addf %204, %224 : vector<4x1xf32>
      %cst_63 = arith.constant 2.000000e+00 : f32
      %226 = vector.broadcast %cst_63 : f32 to vector<4x1xf32>
      %227 = arith.mulf %226, %221 : vector<4x1xf32>
      %228 = arith.addf %218, %227 : vector<4x1xf32>
      %229 = arith.addf %218, %212 : vector<4x1xf32>
      %230 = vector.extract_strided_slice %51 {offsets = [0, 72], sizes = [4, 6], strides = [1, 1]} : vector<4x160xf32> to vector<4x6xf32>
      %231 = vector.extract_strided_slice %51 {offsets = [0, 96], sizes = [4, 6], strides = [1, 1]} : vector<4x160xf32> to vector<4x6xf32>
      %232 = vector.extract_strided_slice %51 {offsets = [0, 120], sizes = [4, 6], strides = [1, 1]} : vector<4x160xf32> to vector<4x6xf32>
      %233 = vector.extract_strided_slice %186 {offsets = [0, 2], sizes = [4, 1], strides = [1, 1]} : vector<4x3xf32> to vector<4x1xf32>
      %234 = arith.mulf %230, %173 : vector<4x6xf32>
      %cst_64 = arith.constant dense<0.000000e+00> : vector<4xf32>
      %235 = vector.multi_reduction <add>, %234, %cst_64 [1] : vector<4x6xf32> to vector<4xf32>
      %236 = vector.shape_cast %235 : vector<4xf32> to vector<4x1xf32>
      %237 = arith.mulf %232, %173 : vector<4x6xf32>
      %cst_65 = arith.constant dense<0.000000e+00> : vector<4xf32>
      %238 = vector.multi_reduction <add>, %237, %cst_65 [1] : vector<4x6xf32> to vector<4xf32>
      %239 = vector.shape_cast %238 : vector<4xf32> to vector<4x1xf32>
      %240 = arith.mulf %231, %173 : vector<4x6xf32>
      %cst_66 = arith.constant dense<0.000000e+00> : vector<4xf32>
      %241 = vector.multi_reduction <add>, %240, %cst_66 [1] : vector<4x6xf32> to vector<4xf32>
      %242 = vector.shape_cast %241 : vector<4xf32> to vector<4x1xf32>
      %243 = arith.divf %233, %239 : vector<4x1xf32>
      %244 = arith.subf %243, %236 : vector<4x1xf32>
      %245 = arith.mulf %244, %244 : vector<4x1xf32>
      %246 = arith.addf %225, %245 : vector<4x1xf32>
      %cst_67 = arith.constant 2.000000e+00 : f32
      %247 = vector.broadcast %cst_67 : f32 to vector<4x1xf32>
      %248 = arith.mulf %247, %242 : vector<4x1xf32>
      %249 = arith.addf %239, %248 : vector<4x1xf32>
      %250 = arith.addf %239, %233 : vector<4x1xf32>
      %251 = math.sqrt %246 : vector<4x1xf32>
      %252 = math.absf %251 : vector<4x1xf32>
      %cst_68 = arith.constant 1.000000e+00 : f32
      %253 = vector.broadcast %cst_68 : f32 to vector<4x1xf32>
      %254 = arith.minimumf %252, %253 : vector<4x1xf32>
      %255 = arith.subf %252, %254 : vector<4x1xf32>
      %cst_69 = arith.constant 5.000000e-01 : f32
      %256 = vector.broadcast %cst_69 : f32 to vector<4x1xf32>
      %257 = arith.mulf %256, %254 : vector<4x1xf32>
      %258 = arith.mulf %257, %254 : vector<4x1xf32>
      %cst_70 = arith.constant 1.000000e+00 : f32
      %259 = vector.broadcast %cst_70 : f32 to vector<4x1xf32>
      %260 = arith.mulf %259, %255 : vector<4x1xf32>
      %261 = arith.addf %258, %260 : vector<4x1xf32>
      %262 = vector.shape_cast %261 : vector<4x1xf32> to vector<1x4x1xf32>
      %cst_71 = arith.constant dense<0.000000e+00> : vector<1xf32>
      %263 = vector.multi_reduction <add>, %262, %cst_71 [1, 2] : vector<1x4x1xf32> to vector<1xf32>
      %264 = vector.shape_cast %263 : vector<1xf32> to vector<1x1x1xf32>
      %265 = vector.extract %264[0, 0, 0] : f32 from vector<1x1x1xf32>
      %266 = vector.broadcast %265 : f32 to vector<1x1xf32>
      %cst_72 = arith.constant 4.000000e+00 : f32
      %267 = vector.broadcast %cst_72 : f32 to vector<1x1xf32>
      %268 = arith.divf %266, %267 : vector<1x1xf32>
      %269 = tpu.iota {dimensions = array<i32: 1>} : vector<1x12xi32>
      %270 = arith.sitofp %269 : vector<1x12xi32> to vector<1x12xf32>
      %cst_73 = arith.constant 0.52359879 : f32
      %271 = vector.broadcast %cst_73 : f32 to vector<1x12xf32>
      %272 = arith.mulf %270, %271 : vector<1x12xf32>
      %273 = vector.extract_strided_slice %51 {offsets = [0, 32], sizes = [4, 12], strides = [1, 1]} : vector<4x160xf32> to vector<4x12xf32>
      %274 = vector.broadcast %272 : vector<1x12xf32> to vector<4x12xf32>
      %275 = arith.addf %273, %274 : vector<4x12xf32>
      %276 = arith.mulf %117, %275 : vector<4x12xf32>
      %cst_74 = arith.constant dense<0.000000e+00> : vector<4xf32>
      %277 = vector.multi_reduction <add>, %276, %cst_74 [1] : vector<4x12xf32> to vector<4xf32>
      %278 = vector.shape_cast %277 : vector<4xf32> to vector<4x1xf32>
      %279 = vector.broadcast %134 : vector<4x1xf32> to vector<4x12xf32>
      %280 = vector.broadcast %272 : vector<1x12xf32> to vector<4x12xf32>
      %281 = arith.addf %279, %280 : vector<4x12xf32>
      %282 = arith.mulf %117, %281 : vector<4x12xf32>
      %cst_75 = arith.constant dense<0.000000e+00> : vector<4xf32>
      %283 = vector.multi_reduction <add>, %282, %cst_75 [1] : vector<4x12xf32> to vector<4xf32>
      %284 = vector.shape_cast %283 : vector<4xf32> to vector<4x1xf32>
      %285 = vector.extract_strided_slice %52 {offsets = [0, 0], sizes = [4, 1], strides = [1, 1]} : vector<4x3xf32> to vector<4x1xf32>
      %286 = vector.extract_strided_slice %52 {offsets = [0, 1], sizes = [4, 1], strides = [1, 1]} : vector<4x3xf32> to vector<4x1xf32>
      %287 = vector.extract_strided_slice %52 {offsets = [0, 2], sizes = [4, 1], strides = [1, 1]} : vector<4x3xf32> to vector<4x1xf32>
      %288 = tpu.iota {dimensions = array<i32: 1>} : vector<1x8xi32>
      %c4_i32 = arith.constant 4 : i32
      %c0_i32_76 = arith.constant 0 : i32
      %289 = arith.cmpi eq, %c4_i32, %c0_i32_76 : i32
      %c1_i32_77 = arith.constant 1 : i32
      %290 = arith.select %289, %c1_i32_77, %c4_i32 : i32
      %291 = vector.broadcast %290 : i32 to vector<1x8xi32>
      %292 = arith.remsi %288, %291 : vector<1x8xi32>
      %c0_i32_78 = arith.constant 0 : i32
      %293 = vector.broadcast %c0_i32_78 : i32 to vector<1x8xi32>
      %294 = arith.cmpi ne, %292, %293 : vector<1x8xi32>
      %c0_i32_79 = arith.constant 0 : i32
      %295 = vector.broadcast %c0_i32_79 : i32 to vector<1x8xi32>
      %296 = arith.cmpi slt, %292, %295 : vector<1x8xi32>
      %c0_i32_80 = arith.constant 0 : i32
      %297 = arith.cmpi slt, %290, %c0_i32_80 : i32
      %298 = vector.broadcast %297 : i1 to vector<1x8xi1>
      %299 = vector.broadcast %298 : vector<1x8xi1> to vector<1x8xi1>
      %300 = arith.xori %296, %299 : vector<1x8xi1>
      %301 = arith.andi %300, %294 : vector<1x8xi1>
      %302 = vector.broadcast %290 : i32 to vector<1x8xi32>
      %303 = arith.addi %292, %302 : vector<1x8xi32>
      %304 = arith.select %301, %303, %292 : vector<1x8xi1>, vector<1x8xi32>
      %c2_i32 = arith.constant 2 : i32
      %305 = vector.broadcast %c2_i32 : i32 to vector<1x8xi32>
      %306 = arith.cmpi slt, %304, %305 : vector<1x8xi32>
      %cst_81 = arith.constant 1.000000e+00 : f32
      %cst_82 = arith.constant -1.000000e+00 : f32
      %307 = vector.broadcast %cst_81 : f32 to vector<1x8xf32>
      %308 = vector.broadcast %cst_82 : f32 to vector<1x8xf32>
      %309 = arith.select %306, %307, %308 : vector<1x8xi1>, vector<1x8xf32>
      %c4_i32_83 = arith.constant 4 : i32
      %310 = vector.broadcast %c4_i32_83 : i32 to vector<1x8xi32>
      %311 = arith.cmpi slt, %288, %310 : vector<1x8xi32>
      %cst_84 = arith.constant 1.000000e+00 : f32
      %cst_85 = arith.constant -1.000000e+00 : f32
      %312 = vector.broadcast %cst_84 : f32 to vector<1x8xf32>
      %313 = vector.broadcast %cst_85 : f32 to vector<1x8xf32>
      %314 = arith.select %311, %312, %313 : vector<1x8xi1>, vector<1x8xf32>
      %c0_i32_86 = arith.constant 0 : i32
      %315 = vector.broadcast %c0_i32_86 : i32 to vector<1x8xi32>
      %316 = arith.cmpi eq, %304, %315 : vector<1x8xi32>
      %c3_i32 = arith.constant 3 : i32
      %317 = vector.broadcast %c3_i32 : i32 to vector<1x8xi32>
      %318 = arith.cmpi eq, %304, %317 : vector<1x8xi32>
      %319 = arith.ori %316, %318 : vector<1x8xi1>
      %cst_87 = arith.constant 1.000000e+00 : f32
      %cst_88 = arith.constant -1.000000e+00 : f32
      %320 = vector.broadcast %cst_87 : f32 to vector<1x8xf32>
      %321 = vector.broadcast %cst_88 : f32 to vector<1x8xf32>
      %322 = arith.select %319, %320, %321 : vector<1x8xi1>, vector<1x8xf32>
      %cst_89 = arith.constant 5.000000e-01 : f32
      %323 = vector.broadcast %cst_89 : f32 to vector<4x1xf32>
      %324 = arith.mulf %207, %323 : vector<4x1xf32>
      %325 = vector.broadcast %324 : vector<4x1xf32> to vector<4x8xf32>
      %326 = vector.broadcast %309 : vector<1x8xf32> to vector<4x8xf32>
      %327 = arith.mulf %325, %326 : vector<4x8xf32>
      %cst_90 = arith.constant 5.000000e-01 : f32
      %328 = vector.broadcast %cst_90 : f32 to vector<4x1xf32>
      %329 = arith.mulf %249, %328 : vector<4x1xf32>
      %330 = vector.broadcast %329 : vector<4x1xf32> to vector<4x8xf32>
      %331 = vector.broadcast %314 : vector<1x8xf32> to vector<4x8xf32>
      %332 = arith.mulf %330, %331 : vector<4x8xf32>
      %cst_91 = arith.constant 5.000000e-01 : f32
      %333 = vector.broadcast %cst_91 : f32 to vector<4x1xf32>
      %334 = arith.mulf %228, %333 : vector<4x1xf32>
      %335 = vector.broadcast %334 : vector<4x1xf32> to vector<4x8xf32>
      %336 = vector.broadcast %322 : vector<1x8xf32> to vector<4x8xf32>
      %337 = arith.mulf %335, %336 : vector<4x8xf32>
      %338 = math.cos %278 : vector<4x1xf32>
      %339 = math.sin %278 : vector<4x1xf32>
      %340 = vector.broadcast %338 : vector<4x1xf32> to vector<4x8xf32>
      %341 = arith.mulf %340, %327 : vector<4x8xf32>
      %342 = vector.broadcast %339 : vector<4x1xf32> to vector<4x8xf32>
      %343 = arith.mulf %342, %337 : vector<4x8xf32>
      %344 = arith.addf %341, %343 : vector<4x8xf32>
      %345 = vector.broadcast %285 : vector<4x1xf32> to vector<4x8xf32>
      %346 = arith.addf %344, %345 : vector<4x8xf32>
      %347 = vector.broadcast %286 : vector<4x1xf32> to vector<4x8xf32>
      %348 = arith.addf %332, %347 : vector<4x8xf32>
      %cst_92 = arith.constant 0.000000e+00 : f32
      %349 = vector.broadcast %cst_92 : f32 to vector<4x1xf32>
      %350 = arith.subf %349, %339 : vector<4x1xf32>
      %351 = vector.broadcast %350 : vector<4x1xf32> to vector<4x8xf32>
      %352 = arith.mulf %351, %327 : vector<4x8xf32>
      %353 = vector.broadcast %338 : vector<4x1xf32> to vector<4x8xf32>
      %354 = arith.mulf %353, %337 : vector<4x8xf32>
      %355 = arith.addf %352, %354 : vector<4x8xf32>
      %356 = vector.broadcast %287 : vector<4x1xf32> to vector<4x8xf32>
      %357 = arith.addf %355, %356 : vector<4x8xf32>
      %358 = vector.extract_strided_slice %53 {offsets = [0, 0], sizes = [4, 1], strides = [1, 1]} : vector<4x3xf32> to vector<4x1xf32>
      %359 = vector.extract_strided_slice %53 {offsets = [0, 1], sizes = [4, 1], strides = [1, 1]} : vector<4x3xf32> to vector<4x1xf32>
      %360 = vector.extract_strided_slice %53 {offsets = [0, 2], sizes = [4, 1], strides = [1, 1]} : vector<4x3xf32> to vector<4x1xf32>
      %361 = tpu.iota {dimensions = array<i32: 1>} : vector<1x8xi32>
      %c4_i32_93 = arith.constant 4 : i32
      %c0_i32_94 = arith.constant 0 : i32
      %362 = arith.cmpi eq, %c4_i32_93, %c0_i32_94 : i32
      %c1_i32_95 = arith.constant 1 : i32
      %363 = arith.select %362, %c1_i32_95, %c4_i32_93 : i32
      %364 = vector.broadcast %363 : i32 to vector<1x8xi32>
      %365 = arith.remsi %361, %364 : vector<1x8xi32>
      %c0_i32_96 = arith.constant 0 : i32
      %366 = vector.broadcast %c0_i32_96 : i32 to vector<1x8xi32>
      %367 = arith.cmpi ne, %365, %366 : vector<1x8xi32>
      %c0_i32_97 = arith.constant 0 : i32
      %368 = vector.broadcast %c0_i32_97 : i32 to vector<1x8xi32>
      %369 = arith.cmpi slt, %365, %368 : vector<1x8xi32>
      %c0_i32_98 = arith.constant 0 : i32
      %370 = arith.cmpi slt, %363, %c0_i32_98 : i32
      %371 = vector.broadcast %370 : i1 to vector<1x8xi1>
      %372 = vector.broadcast %371 : vector<1x8xi1> to vector<1x8xi1>
      %373 = arith.xori %369, %372 : vector<1x8xi1>
      %374 = arith.andi %373, %367 : vector<1x8xi1>
      %375 = vector.broadcast %363 : i32 to vector<1x8xi32>
      %376 = arith.addi %365, %375 : vector<1x8xi32>
      %377 = arith.select %374, %376, %365 : vector<1x8xi1>, vector<1x8xi32>
      %c2_i32_99 = arith.constant 2 : i32
      %378 = vector.broadcast %c2_i32_99 : i32 to vector<1x8xi32>
      %379 = arith.cmpi slt, %377, %378 : vector<1x8xi32>
      %cst_100 = arith.constant 1.000000e+00 : f32
      %cst_101 = arith.constant -1.000000e+00 : f32
      %380 = vector.broadcast %cst_100 : f32 to vector<1x8xf32>
      %381 = vector.broadcast %cst_101 : f32 to vector<1x8xf32>
      %382 = arith.select %379, %380, %381 : vector<1x8xi1>, vector<1x8xf32>
      %c4_i32_102 = arith.constant 4 : i32
      %383 = vector.broadcast %c4_i32_102 : i32 to vector<1x8xi32>
      %384 = arith.cmpi slt, %361, %383 : vector<1x8xi32>
      %cst_103 = arith.constant 1.000000e+00 : f32
      %cst_104 = arith.constant -1.000000e+00 : f32
      %385 = vector.broadcast %cst_103 : f32 to vector<1x8xf32>
      %386 = vector.broadcast %cst_104 : f32 to vector<1x8xf32>
      %387 = arith.select %384, %385, %386 : vector<1x8xi1>, vector<1x8xf32>
      %c0_i32_105 = arith.constant 0 : i32
      %388 = vector.broadcast %c0_i32_105 : i32 to vector<1x8xi32>
      %389 = arith.cmpi eq, %377, %388 : vector<1x8xi32>
      %c3_i32_106 = arith.constant 3 : i32
      %390 = vector.broadcast %c3_i32_106 : i32 to vector<1x8xi32>
      %391 = arith.cmpi eq, %377, %390 : vector<1x8xi32>
      %392 = arith.ori %389, %391 : vector<1x8xi1>
      %cst_107 = arith.constant 1.000000e+00 : f32
      %cst_108 = arith.constant -1.000000e+00 : f32
      %393 = vector.broadcast %cst_107 : f32 to vector<1x8xf32>
      %394 = vector.broadcast %cst_108 : f32 to vector<1x8xf32>
      %395 = arith.select %392, %393, %394 : vector<1x8xi1>, vector<1x8xf32>
      %cst_109 = arith.constant 5.000000e-01 : f32
      %396 = vector.broadcast %cst_109 : f32 to vector<4x1xf32>
      %397 = arith.mulf %208, %396 : vector<4x1xf32>
      %398 = vector.broadcast %397 : vector<4x1xf32> to vector<4x8xf32>
      %399 = vector.broadcast %382 : vector<1x8xf32> to vector<4x8xf32>
      %400 = arith.mulf %398, %399 : vector<4x8xf32>
      %cst_110 = arith.constant 5.000000e-01 : f32
      %401 = vector.broadcast %cst_110 : f32 to vector<4x1xf32>
      %402 = arith.mulf %250, %401 : vector<4x1xf32>
      %403 = vector.broadcast %402 : vector<4x1xf32> to vector<4x8xf32>
      %404 = vector.broadcast %387 : vector<1x8xf32> to vector<4x8xf32>
      %405 = arith.mulf %403, %404 : vector<4x8xf32>
      %cst_111 = arith.constant 5.000000e-01 : f32
      %406 = vector.broadcast %cst_111 : f32 to vector<4x1xf32>
      %407 = arith.mulf %229, %406 : vector<4x1xf32>
      %408 = vector.broadcast %407 : vector<4x1xf32> to vector<4x8xf32>
      %409 = vector.broadcast %395 : vector<1x8xf32> to vector<4x8xf32>
      %410 = arith.mulf %408, %409 : vector<4x8xf32>
      %411 = math.cos %284 : vector<4x1xf32>
      %412 = math.sin %284 : vector<4x1xf32>
      %413 = vector.broadcast %411 : vector<4x1xf32> to vector<4x8xf32>
      %414 = arith.mulf %413, %400 : vector<4x8xf32>
      %415 = vector.broadcast %412 : vector<4x1xf32> to vector<4x8xf32>
      %416 = arith.mulf %415, %410 : vector<4x8xf32>
      %417 = arith.addf %414, %416 : vector<4x8xf32>
      %418 = vector.broadcast %358 : vector<4x1xf32> to vector<4x8xf32>
      %419 = arith.addf %417, %418 : vector<4x8xf32>
      %420 = vector.broadcast %359 : vector<4x1xf32> to vector<4x8xf32>
      %421 = arith.addf %405, %420 : vector<4x8xf32>
      %cst_112 = arith.constant 0.000000e+00 : f32
      %422 = vector.broadcast %cst_112 : f32 to vector<4x1xf32>
      %423 = arith.subf %422, %412 : vector<4x1xf32>
      %424 = vector.broadcast %423 : vector<4x1xf32> to vector<4x8xf32>
      %425 = arith.mulf %424, %400 : vector<4x8xf32>
      %426 = vector.broadcast %411 : vector<4x1xf32> to vector<4x8xf32>
      %427 = arith.mulf %426, %410 : vector<4x8xf32>
      %428 = arith.addf %425, %427 : vector<4x8xf32>
      %429 = vector.broadcast %360 : vector<4x1xf32> to vector<4x8xf32>
      %430 = arith.addf %428, %429 : vector<4x8xf32>
      %431 = vector.extract_strided_slice %53 {offsets = [0, 0], sizes = [4, 1], strides = [1, 1]} : vector<4x3xf32> to vector<4x1xf32>
      %cst_113 = arith.constant 2.000000e+00 : f32
      %432 = vector.broadcast %cst_113 : f32 to vector<4x1xf32>
      %433 = arith.mulf %432, %431 : vector<4x1xf32>
      %434 = vector.broadcast %433 : vector<4x1xf32> to vector<4x8xf32>
      %435 = arith.subf %434, %419 : vector<4x8xf32>
      %436 = vector.extract_strided_slice %53 {offsets = [0, 2], sizes = [4, 1], strides = [1, 1]} : vector<4x3xf32> to vector<4x1xf32>
      %cst_114 = arith.constant 2.000000e+00 : f32
      %437 = vector.broadcast %cst_114 : f32 to vector<4x1xf32>
      %438 = arith.mulf %437, %436 : vector<4x1xf32>
      %439 = vector.broadcast %438 : vector<4x1xf32> to vector<4x8xf32>
      %440 = arith.subf %439, %430 : vector<4x8xf32>
      %441 = arith.subf %346, %419 : vector<4x8xf32>
      %442 = arith.subf %348, %421 : vector<4x8xf32>
      %443 = arith.subf %357, %430 : vector<4x8xf32>
      %444 = arith.mulf %441, %441 : vector<4x8xf32>
      %445 = arith.mulf %442, %442 : vector<4x8xf32>
      %446 = arith.addf %444, %445 : vector<4x8xf32>
      %447 = arith.mulf %443, %443 : vector<4x8xf32>
      %448 = arith.addf %446, %447 : vector<4x8xf32>
      %449 = math.sqrt %448 : vector<4x8xf32>
      %450 = arith.subf %346, %435 : vector<4x8xf32>
      %451 = arith.subf %357, %440 : vector<4x8xf32>
      %452 = arith.mulf %450, %450 : vector<4x8xf32>
      %453 = arith.mulf %442, %442 : vector<4x8xf32>
      %454 = arith.addf %452, %453 : vector<4x8xf32>
      %455 = arith.mulf %451, %451 : vector<4x8xf32>
      %456 = arith.addf %454, %455 : vector<4x8xf32>
      %457 = math.sqrt %456 : vector<4x8xf32>
      %458 = arith.minimumf %449, %457 : vector<4x8xf32>
      %459 = math.absf %458 : vector<4x8xf32>
      %cst_115 = arith.constant 1.000000e+00 : f32
      %460 = vector.broadcast %cst_115 : f32 to vector<4x8xf32>
      %461 = arith.minimumf %459, %460 : vector<4x8xf32>
      %462 = arith.subf %459, %461 : vector<4x8xf32>
      %cst_116 = arith.constant 5.000000e-01 : f32
      %463 = vector.broadcast %cst_116 : f32 to vector<4x8xf32>
      %464 = arith.mulf %463, %461 : vector<4x8xf32>
      %465 = arith.mulf %464, %461 : vector<4x8xf32>
      %cst_117 = arith.constant 1.000000e+00 : f32
      %466 = vector.broadcast %cst_117 : f32 to vector<4x8xf32>
      %467 = arith.mulf %466, %462 : vector<4x8xf32>
      %468 = arith.addf %465, %467 : vector<4x8xf32>
      %469 = vector.shape_cast %468 : vector<4x8xf32> to vector<1x4x8xf32>
      %cst_118 = arith.constant dense<0.000000e+00> : vector<1xf32>
      %470 = vector.multi_reduction <add>, %469, %cst_118 [1, 2] : vector<1x4x8xf32> to vector<1xf32>
      %471 = vector.shape_cast %470 : vector<1xf32> to vector<1x1x1xf32>
      %472 = vector.extract %471[0, 0, 0] : f32 from vector<1x1x1xf32>
      %473 = vector.broadcast %472 : f32 to vector<1x1xf32>
      %cst_119 = arith.constant 3.200000e+01 : f32
      %474 = vector.broadcast %cst_119 : f32 to vector<1x1xf32>
      %475 = arith.divf %473, %474 : vector<1x1xf32>
      %476 = arith.addf %76, %129 : vector<1x1xf32>
      %477 = arith.addf %476, %185 : vector<1x1xf32>
      %cst_120 = arith.constant 2.000000e+01 : f32
      %478 = vector.broadcast %cst_120 : f32 to vector<1x1xf32>
      %479 = arith.mulf %154, %478 : vector<1x1xf32>
      %480 = arith.addf %477, %479 : vector<1x1xf32>
      %cst_121 = arith.constant 2.000000e+01 : f32
      %481 = vector.broadcast %cst_121 : f32 to vector<1x1xf32>
      %482 = arith.mulf %268, %481 : vector<1x1xf32>
      %483 = arith.addf %480, %482 : vector<1x1xf32>
      %484 = arith.addf %483, %98 : vector<1x1xf32>
      %cst_122 = arith.constant 1.000000e+01 : f32
      %485 = vector.broadcast %cst_122 : f32 to vector<1x1xf32>
      %486 = arith.mulf %485, %475 : vector<1x1xf32>
      %487 = arith.addf %484, %486 : vector<1x1xf32>
      %cst_123 = arith.constant 1.000000e+00 : f32
      %488 = vector.broadcast %cst_123 : f32 to vector<1x1xf32>
      %489 = arith.mulf %488, %487 : vector<1x1xf32>
      %cst_124 = arith.constant 1.000000e+00 : f32
      %490 = vector.broadcast %cst_124 : f32 to vector<1x1xf32>
      %491 = arith.mulf %490, %76 : vector<1x1xf32>
      %cst_125 = arith.constant 1.000000e+00 : f32
      %492 = vector.broadcast %cst_125 : f32 to vector<1x1xf32>
      %493 = arith.mulf %492, %129 : vector<1x1xf32>
      %cst_126 = arith.constant 1.000000e+00 : f32
      %494 = vector.broadcast %cst_126 : f32 to vector<1x1xf32>
      %495 = arith.mulf %494, %185 : vector<1x1xf32>
      %cst_127 = arith.constant 1.000000e+00 : f32
      %496 = vector.broadcast %cst_127 : f32 to vector<1x1xf32>
      %497 = arith.mulf %496, %154 : vector<1x1xf32>
      %cst_128 = arith.constant 2.000000e+01 : f32
      %498 = vector.broadcast %cst_128 : f32 to vector<1x1xf32>
      %499 = arith.mulf %497, %498 : vector<1x1xf32>
      %cst_129 = arith.constant 1.000000e+00 : f32
      %500 = vector.broadcast %cst_129 : f32 to vector<1x1xf32>
      %501 = arith.mulf %500, %268 : vector<1x1xf32>
      %cst_130 = arith.constant 2.000000e+01 : f32
      %502 = vector.broadcast %cst_130 : f32 to vector<1x1xf32>
      %503 = arith.mulf %501, %502 : vector<1x1xf32>
      %cst_131 = arith.constant 1.000000e+00 : f32
      %504 = vector.broadcast %cst_131 : f32 to vector<1x1xf32>
      %505 = arith.mulf %504, %268 : vector<1x1xf32>
      %cst_132 = arith.constant 2.000000e+01 : f32
      %506 = vector.broadcast %cst_132 : f32 to vector<1x1xf32>
      %507 = arith.mulf %505, %506 : vector<1x1xf32>
      %cst_133 = arith.constant 1.000000e+00 : f32
      %508 = vector.broadcast %cst_133 : f32 to vector<1x1xf32>
      %509 = arith.mulf %508, %475 : vector<1x1xf32>
      %cst_134 = arith.constant 1.000000e+01 : f32
      %510 = vector.broadcast %cst_134 : f32 to vector<1x1xf32>
      %511 = arith.mulf %509, %510 : vector<1x1xf32>
      %c0_135 = arith.constant 0 : index
      %c0_136 = arith.constant 0 : index
      %512 = vector.load %arg6[%c0_135, %c0_136] : memref<1x1xf32, #tpu.memory_space<vmem>>, vector<1x1xf32>
      %513 = tpu.iota {dimensions = array<i32: 2>} : vector<1x8x128xi32>
      %cst_137 = arith.constant 0.000000e+00 : f32
      %514 = vector.broadcast %cst_137 : f32 to vector<1x8x128xf32>
      %c0_i32_138 = arith.constant 0 : i32
      %515 = vector.broadcast %c0_i32_138 : i32 to vector<1x8x128xi32>
      %516 = arith.cmpi eq, %513, %515 : vector<1x8x128xi32>
      %517 = vector.shape_cast %489 : vector<1x1xf32> to vector<1x1x1xf32>
      %518 = vector.broadcast %517 : vector<1x1x1xf32> to vector<1x8x128xf32>
      %519 = arith.select %516, %518, %514 : vector<1x8x128xi1>, vector<1x8x128xf32>
      %c1_i32_139 = arith.constant 1 : i32
      %520 = vector.broadcast %c1_i32_139 : i32 to vector<1x8x128xi32>
      %521 = arith.cmpi eq, %513, %520 : vector<1x8x128xi32>
      %522 = vector.shape_cast %491 : vector<1x1xf32> to vector<1x1x1xf32>
      %523 = vector.broadcast %522 : vector<1x1x1xf32> to vector<1x8x128xf32>
      %524 = arith.select %521, %523, %519 : vector<1x8x128xi1>, vector<1x8x128xf32>
      %c2_i32_140 = arith.constant 2 : i32
      %525 = vector.broadcast %c2_i32_140 : i32 to vector<1x8x128xi32>
      %526 = arith.cmpi eq, %513, %525 : vector<1x8x128xi32>
      %527 = vector.shape_cast %493 : vector<1x1xf32> to vector<1x1x1xf32>
      %528 = vector.broadcast %527 : vector<1x1x1xf32> to vector<1x8x128xf32>
      %529 = arith.select %526, %528, %524 : vector<1x8x128xi1>, vector<1x8x128xf32>
      %c3_i32_141 = arith.constant 3 : i32
      %530 = vector.broadcast %c3_i32_141 : i32 to vector<1x8x128xi32>
      %531 = arith.cmpi eq, %513, %530 : vector<1x8x128xi32>
      %532 = vector.shape_cast %495 : vector<1x1xf32> to vector<1x1x1xf32>
      %533 = vector.broadcast %532 : vector<1x1x1xf32> to vector<1x8x128xf32>
      %534 = arith.select %531, %533, %529 : vector<1x8x128xi1>, vector<1x8x128xf32>
      %c4_i32_142 = arith.constant 4 : i32
      %535 = vector.broadcast %c4_i32_142 : i32 to vector<1x8x128xi32>
      %536 = arith.cmpi eq, %513, %535 : vector<1x8x128xi32>
      %537 = vector.shape_cast %499 : vector<1x1xf32> to vector<1x1x1xf32>
      %538 = vector.broadcast %537 : vector<1x1x1xf32> to vector<1x8x128xf32>
      %539 = arith.select %536, %538, %534 : vector<1x8x128xi1>, vector<1x8x128xf32>
      %c5_i32 = arith.constant 5 : i32
      %540 = vector.broadcast %c5_i32 : i32 to vector<1x8x128xi32>
      %541 = arith.cmpi eq, %513, %540 : vector<1x8x128xi32>
      %542 = vector.shape_cast %503 : vector<1x1xf32> to vector<1x1x1xf32>
      %543 = vector.broadcast %542 : vector<1x1x1xf32> to vector<1x8x128xf32>
      %544 = arith.select %541, %543, %539 : vector<1x8x128xi1>, vector<1x8x128xf32>
      %c6_i32 = arith.constant 6 : i32
      %545 = vector.broadcast %c6_i32 : i32 to vector<1x8x128xi32>
      %546 = arith.cmpi eq, %513, %545 : vector<1x8x128xi32>
      %547 = vector.shape_cast %507 : vector<1x1xf32> to vector<1x1x1xf32>
      %548 = vector.broadcast %547 : vector<1x1x1xf32> to vector<1x8x128xf32>
      %549 = arith.select %546, %548, %544 : vector<1x8x128xi1>, vector<1x8x128xf32>
      %c7_i32 = arith.constant 7 : i32
      %550 = vector.broadcast %c7_i32 : i32 to vector<1x8x128xi32>
      %551 = arith.cmpi eq, %513, %550 : vector<1x8x128xi32>
      %552 = vector.shape_cast %511 : vector<1x1xf32> to vector<1x1x1xf32>
      %553 = vector.broadcast %552 : vector<1x1x1xf32> to vector<1x8x128xf32>
      %554 = arith.select %551, %553, %549 : vector<1x8x128xi1>, vector<1x8x128xf32>
      %c8_i32 = arith.constant 8 : i32
      %555 = vector.broadcast %c8_i32 : i32 to vector<1x8x128xi32>
      %556 = arith.cmpi eq, %513, %555 : vector<1x8x128xi32>
      %557 = vector.shape_cast %512 : vector<1x1xf32> to vector<1x1x1xf32>
      %558 = vector.broadcast %557 : vector<1x1x1xf32> to vector<1x8x128xf32>
      %559 = arith.select %556, %558, %554 : vector<1x8x128xi1>, vector<1x8x128xf32>
      %c0_143 = arith.constant 0 : index
      %c0_144 = arith.constant 0 : index
      %c0_145 = arith.constant 0 : index
      %560 = vector.load %arg5[%c0_143, %c0_144, %c0_145] : memref<1x8x128xf32, #tpu.memory_space<vmem>>, vector<1x8x128xf32>
      tpu.vector_store %arg5[%c0_143, %c0_144, %c0_145], %559 {strides = array<i32>} : memref<1x8x128xf32, #tpu.memory_space<vmem>>, vector<1x8x128xf32>,
    } else {
    }
    return
  }
  func.func @transform_0(%arg0: i32, %arg1: i32) -> (i32, i32) {
    %c0_i32 = arith.constant 0 : i32
    %c0_i32_0 = arith.constant 0 : i32
    %c0_i32_1 = arith.constant 0 : i32
    return %c0_i32, %c0_i32_0 : i32, i32
  }
  func.func @transform_1(%arg0: i32, %arg1: i32) -> (i32, i32) {
    %c1_i32 = arith.constant 1 : i32
    %0 = arith.muli %arg0, %c1_i32 : i32
    %1 = arith.addi %0, %arg1 : i32
    %c0_i32 = arith.constant 0 : i32
    %2 = arith.minsi %1, %c0_i32 : i32
    %c0_i32_0 = arith.constant 0 : i32
    %c0_i32_1 = arith.constant 0 : i32
    return %c0_i32_0, %2 : i32, i32
  }
  func.func @transform_2(%arg0: i32, %arg1: i32) -> (i32, i32) {
    %c1_i32 = arith.constant 1 : i32
    %0 = arith.muli %arg0, %c1_i32 : i32
    %1 = arith.addi %0, %arg1 : i32
    %c0_i32 = arith.constant 0 : i32
    %2 = arith.minsi %1, %c0_i32 : i32
    %c0_i32_0 = arith.constant 0 : i32
    %c0_i32_1 = arith.constant 0 : i32
    return %c0_i32_0, %2 : i32, i32
  }
  func.func @transform_3(%arg0: i32, %arg1: i32) -> (i32, i32, i32) {
    %c0_i32 = arith.constant 0 : i32
    %c0_i32_0 = arith.constant 0 : i32
    %c0_i32_1 = arith.constant 0 : i32
    return %arg0, %c0_i32, %c0_i32_0 : i32, i32, i32
  }
}

</mosaic_0001>

<llo_original>
// kernel: tpu_custom_call.1
$region0: #{tpu_custom_call.1}
  #allocation0 [shape = 'u32[]', space=smem, size = 0x4, offset = 0x4, fixed_abs, tag = 'smem constant byte address 0x4 - core index']
  #allocation1 [shape = 'u32[144,128]{1,0:T(1,128)}', space=vmem, size = 0x12000, scoped, tag = 'internal scratch']
  #allocation2 [shape = 'f32[1,1]{1,0:T(1,128)}', space=vmem, size = 0x200, scoped, tag = 'scratch operand']
  %s0 = inlined_call_operand.hbm [shape: f32[4,160], index: 0, kind: input, shape index: {}]
  %s1 = inlined_call_operand.hbm [shape: f32[4,128], index: 1, kind: input, shape index: {}]
  %s2 = inlined_call_operand.vmem [shape: s32[4,128], index: 2, kind: input, shape index: {}]
  %s3 = inlined_call_operand.hbm [shape: f32[1,8,128], index: 3, kind: output, shape index: {}]
  %s4 = sld [smem:[#allocation0]]
  $region42: #{tpu_custom_call.1} parent=0
    _
  %s6 = ssub.s32 1, %s4
  %s7 = scalar_select 0, %s6, %s4
  $region1: #{tpu_custom_call.1} parent=0
    #allocation3 [shape = 'u8[4096]{0}', space=vmem, size = 0x1000, scoped, tag = 'input window, operand 0, single buffered']
    #allocation4 [shape = 's32[1]{0}', space=sflag, size = 0x4, scoped, tag = 'scoped memory for tpu_custom_call.1']
    #allocation5 [shape = 's32[1]{0}', space=sflag, size = 0x4, scoped, tag = 'scoped memory for tpu_custom_call.1']
    #allocation6 [shape = 'u8[2048]{0}', space=vmem, size = 0x800, scoped, tag = 'input window, operand 1, single buffered']
    #allocation7 [shape = 's32[1]{0}', space=sflag, size = 0x4, scoped, tag = 'scoped memory for tpu_custom_call.1']
    #allocation8 [shape = 'u8[4096]{0}', space=vmem, size = 0x1000, scoped, tag = 'output window, operand 0, single buffered']
    %8 = vsyncpa [#allocation4], 0
    %9 = vsyncpa [#allocation7], 0
    %10 = vsyncpa [#allocation5], 0
    // Predicated region
    $region2: #{tpu_custom_call.1} parent=1 // pred_check
      _
    $region3: #{tpu_custom_call.1} parent=1 // pred_check_branch
      %12 = sbr.rel (0) target = $region5
    $region4: #{tpu_custom_call.1} parent=1 // pred_region
      %s14 = ssub.s32 128, 128
      %15 = vsyncadd [#allocation4], %s14
      %s17 = sshll.u32 [#allocation3], 4
      %s18 = int_to_ptr.vmem [resolvable:$true] %s17
      %20 = dma.hbm_to_vmem [thread:$0]  %s0, 128, %s18, [#allocation4]
    $region5: #{tpu_custom_call.1} parent=1 // pred_fallthru
      _
    // Predicated region
    $region6: #{tpu_custom_call.1} parent=1 // pred_check
      _
    $region7: #{tpu_custom_call.1} parent=1 // pred_check_branch
      %22 = sbr.rel (0) target = $region9
    $region8: #{tpu_custom_call.1} parent=1 // pred_region
      %s23 = sadd.s32 0, 0
      %p24 = scmp.lt.s32.totalorder %s23, 0
      %s25 = scalar_select %p24, %s23, 0
      %s27 = ssub.s32 64, 64
      %28 = vsyncadd [#allocation7], %s27
      %s29 = smul.addr %s25, 64
      %s30 = scalar_lea.hbm %s1, %s29
      %s32 = sshll.u32 [#allocation6], 4
      %s33 = int_to_ptr.vmem [resolvable:$true] %s32
      %35 = dma.hbm_to_vmem [thread:$0]  %s30, 64, %s33, [#allocation7]
    $region9: #{tpu_custom_call.1} parent=1 // pred_fallthru
      _
    // Predicated region
    $region10: #{tpu_custom_call.1} parent=1 // pred_check
      _
    $region11: #{tpu_custom_call.1} parent=1 // pred_check_branch
      %37 = sbr.rel (0) target = $region13
    $region12: #{tpu_custom_call.1} parent=1 // pred_region
      %s38 = sadd.s32 0, 0
      %p39 = scmp.lt.s32.totalorder %s38, 0
      %s40 = scalar_select %p39, %s38, 0
      %p41 = scmp.lt.s32.totalorder %s40, 0
      %s42 = scalar_select %p41, %s40, 0
      %s43 = smul.addr %s42, 4
      %s44 = scalar_lea.vmem %s2, %s43
      %s45 = sadd.s32 0, 0
      %p46 = scmp.lt.s32.totalorder %s45, 0
      %s47 = scalar_select %p46, %s45, 0
    $region13: #{tpu_custom_call.1} parent=1 // pred_fallthru
      _
    // Predicated region
    $region14: #{tpu_custom_call.1} parent=1 // pred_check
      _
    $region15: #{tpu_custom_call.1} parent=1 // pred_check_branch
      %49 = sbr.rel (0) target = $region17
    $region16: #{tpu_custom_call.1} parent=1 // pred_region
      %50 = dma.done [#allocation4], 128
    $region17: #{tpu_custom_call.1} parent=1 // pred_fallthru
      _
    // Predicated region
    $region18: #{tpu_custom_call.1} parent=1 // pred_check
      _
    $region19: #{tpu_custom_call.1} parent=1 // pred_check_branch
      %52 = sbr.rel (0) target = $region21
    $region20: #{tpu_custom_call.1} parent=1 // pred_region
      %53 = dma.done [#allocation7], 64
    $region21: #{tpu_custom_call.1} parent=1 // pred_fallthru
      _
    %s54 = sadd.s32 0, 0
    %p55 = scmp.lt.s32.totalorder %s54, 0
    %s56 = scalar_select %p55, %s54, 0
    %p57 = scmp.lt.s32.totalorder %s56, 0
    %s58 = scalar_select %p57, %s56, 0
    %s59 = smul.addr %s58, 4
    %s60 = scalar_lea.vmem %s2, %s59
    %s61 = sadd.s32 0, 0
    %p62 = scmp.lt.s32.totalorder %s61, 0
    %s63 = scalar_select %p62, %s61, 0
    %s64 = sadd.s32 0, 0
    %p65 = scmp.lt.s32.totalorder %s64, 0
    %s66 = scalar_select %p65, %s64, 0
    %p67 = scmp.lt.s32.totalorder %s66, 0
    %s68 = scalar_select %p67, %s66, 0
    %s69 = smul.addr %s68, 4
    %s70 = scalar_lea.vmem %s2, %s69
    %s71 = sadd.s32 0, 0
    %p72 = scmp.lt.s32.totalorder %s71, 0
    %s73 = scalar_select %p72, %s71, 0
    %p74 = scmp.eq.s32.totalorder 0, 0
    // Predicated region
    $region22: #{tpu_custom_call.1} parent=1 // pred_check
      %p75 = pneg %p74
    $region23: #{tpu_custom_call.1} parent=1 // pred_check_branch
      %77 = sbr.rel (%p75) target = $region25
    $region24: #{tpu_custom_call.1} parent=1 // pred_region
      %vm78 = vcmask 0
      %79 = vst.msk [vmem:[#allocation2] sm:$0x1] %vm78, 0.0
    $region25: #{tpu_custom_call.1} parent=1 // pred_fallthru
      _
    %v80 = vld [vmem:[#allocation6] sm:$0xf]
    %v81 = vld [vmem:[%s70] sm:$0xf]
    %v82 = vlaneseq
    %v83 = vand.u32 %v82, 127
    %s84 = sadd.s32 0, 0
    %s85 = smul.u32 %s84, 128
    %v86 = vstv %s85
    %v87 = vadd.s32 %v86, %v83
    %vm88 = vcmp.lt.s32.totalorder %v87, 128
    %v89 = vsel %vm88, %v80, 0.0
    %vm90 = vcmp.eq.s32.totalorder %v81, 1
    %v91 = vsel %vm90, 1.0, 0.0
    %v92 = vmax.f32 %v89, 0.0
    %v93 = vmul.f32 %v89, %v91
    %v94 = vsub.f32 %v92, %v93
    %v95 = vand.u32 2147483647, %v89
    %v96 = vsub.f32 0.0, %v95
    %v97 = vmul.f32 %v96, 1.442695
    %v98 = vpow.pop %v97
    %v99 = vadd.f32 %v98, 1.0
    %v100 = vlog2.pop %v99
    %v101 = vmul.f32 %v100, 0.6931472
    %v102 = vadd.f32 %v94, %v101
    %v103 = vsel %vm88, %v102, 0.0
    %v104 = vld [vmem:[#allocation2] sm:$0x1]
    %vm105 = vcmask 1043456
    %v106 = vsel %vm105, %v103, 0.0
    %107 = vadd.xlane.f32.xlu0 %v106
    %v108 = vpop.xlane.xlu0 %107
    %v109 = vrot.slane %v108, 4
    %v110 = vadd.f32 %v108, %v109
    %v111 = vrot.slane %v110, 2
    %v112 = vadd.f32 %v110, %v111
    %v113 = vrot.slane %v112, 1
    %v114 = vadd.f32 %v112, %v113
    %s115 = vtos %v114
    %v116 = vstv %s115
    %v117 = vadd.f32 %v104, %v116
    %vm118 = vcmask 0
    %119 = vst.msk [vmem:[#allocation2] sm:$0x1] %vm118, %v117
    %p120 = scmp.ne.s32.totalorder 0, 0
    %p121 = pnand %p74, %p120
    %p122 = pneg %p121
    // Predicated region
    $region26: #{tpu_custom_call.1} parent=1 // pred_check
      _
    $region27: #{tpu_custom_call.1} parent=1 // pred_check_branch
      %124 = sbr.rel (%p121) target = $region29
    $region28: #{tpu_custom_call.1} parent=1 // pred_region
      %vm125 = vcmp.eq.s32.totalorder %v83, 8
      %v126 = vld [vmem:[#allocation2] sm:$0x1]
      %v128 = vlaneseq
      %v129 = vshrl.u32 %v128, 7
      %v130 = vsub.s32 0, %v129
      %v131 = vrot.slane %v126, %v130
      %132 = vset.pattern.permute.xlu0 0
      %133 = vperm.xlu0 %132, %v131
      %v134 = vpop.permute.xlu0 %133
      %v136 = vsel %vm125, %v134, 0.0
      %137 = vst [vmem:[#allocation8] sm:$0xff] %v136
    $region29: #{tpu_custom_call.1} parent=1 // pred_fallthru
      _
    %p138 = scmp.eq.s32.totalorder 0, 0
    %p139 = pnand %p74, %p138
    %p140 = pneg %p139
    // Predicated region
    $region30: #{tpu_custom_call.1} parent=1 // pred_check
      _
    $region31: #{tpu_custom_call.1} parent=1 // pred_check_branch
      %142 = sbr.rel (%p139) target = $region33
    $region32: #{tpu_custom_call.1} parent=1 // pred_region
      %v143 = vld [vmem:[#allocation3] sm:$0xff]
      %v145 = vrot.slane %v143, 4
      %147 = vrot.lane.b32.xlu0 %v143, 120
      %v148 = vpop.permute.xlu0 %147
      %v149 = vrot.slane %v148, 4
      %v151 = vsub.f32 %v145, %v149
      %v152 = vmul.f32 %v151, %v151
      %vm153 = vcmask 19456
      %v154 = vsel %vm153, %v152, 0.0
      %155 = vadd.xlane.f32.xlu0 %v154
      %v156 = vpop.xlane.xlu0 %155
      %v157 = vrsqrt.pop %v156
      %v158 = vmul.f32 %v156, %v157
      %vm159 = vcmp.eq.f32.partialorder %v156, inf
      %v160 = vsel %vm159, %v156, %v158
      %vm161 = vcmp.eq.f32.partialorder %v156, 0.0
      %v162 = vand.u32 %v156, 2147483648
      %v163 = vsel %vm161, %v162, %v160
      %v164 = vand.u32 2147483647, %v163
      %v165 = vmin.f32 %v164, 2.0
      %v166 = vsub.f32 %v164, %v165
      %v167 = vmul.f32 %v165, 0.5
      %v168 = vmul.f32 %v167, %v165
      %v169 = vmul.f32 %v166, 2.0
      %v170 = vadd.f32 %v168, %v169
      %vm171 = vcmask 3072
      %v172 = vsel %vm171, %v170, 0.0
      %173 = vadd.xlane.f32.xlu0 %v172
      %v174 = vpop.xlane.xlu0 %173
      %v175 = vrot.slane %v174, 4
      %v176 = vadd.f32 %v174, %v175
      %v177 = vrot.slane %v176, 2
      %v178 = vadd.f32 %v176, %v177
      %v179 = vrot.slane %v178, 1
      %v180 = vadd.f32 %v178, %v179
      %s181 = vtos %v180
      %v182 = vstv %s181
      %v183 = vrcp.pop 4.0
      %v184 = vmul.f32 %v182, %v183
      %185 = vrot.lane.b32.xlu0 %v143, 112
      %v186 = vpop.permute.xlu0 %185
      %v187 = vrot.slane %v186, 4
      %v189 = vsub.f32 %v145, %v187
      %v190 = vmul.f32 %v189, %v189
      %v191 = vsel %vm153, %v190, 0.0
      %192 = vadd.xlane.f32.xlu0 %v191
      %v193 = vpop.xlane.xlu0 %192
      %v194 = vrsqrt.pop %v193
      %v195 = vmul.f32 %v193, %v194
      %vm196 = vcmp.eq.f32.partialorder %v193, inf
      %v197 = vsel %vm196, %v193, %v195
      %vm198 = vcmp.eq.f32.partialorder %v193, 0.0
      %v199 = vand.u32 %v193, 2147483648
      %v200 = vsel %vm198, %v199, %v197
      %v201 = vand.u32 2147483647, %v200
      %v202 = vmin.f32 %v201, 1.0
      %v203 = vsub.f32 %v201, %v202
      %v204 = vmul.f32 %v202, 0.5
      %v205 = vmul.f32 %v204, %v202
      %v206 = vadd.f32 %v205, %v203
      %v207 = vsel %vm171, %v206, 0.0
      %208 = vadd.xlane.f32.xlu0 %v207
      %v209 = vpop.xlane.xlu0 %208
      %v210 = vrot.slane %v209, 4
      %v211 = vadd.f32 %v209, %v210
      %v212 = vrot.slane %v211, 2
      %v213 = vadd.f32 %v211, %v212
      %v214 = vrot.slane %v213, 1
      %v215 = vadd.f32 %v213, %v214
      %s216 = vtos %v215
      %v217 = vstv %s216
      %v218 = vmul.f32 %v217, %v183
      %vm219 = vcmask 93184
      %v220 = vsel %vm219, %v143, -inf
      %221 = vmax.xlane.f32.xlu0 %v220
      %v222 = vpop.xlane.xlu0 %221
      %v223 = vsub.f32 %v143, %v222
      %v224 = vmul.f32 %v223, 1.442695
      %v225 = vpow.pop %v224
      %v226 = vsel %vm219, %v225, 0.0
      %227 = vadd.xlane.f32.xlu0 %v226
      %v228 = vpop.xlane.xlu0 %227
      %v229 = vlog2.pop %v228
      %v230 = vmul.f32 %v229, 0.6931472
      %v231 = vadd.f32 %v222, %v230
      %v232 = vsub.f32 %v143, %v231
      %v233 = vcvt.s32.f32 %v83
      %234 = vset.pattern.permute.xlu0 24
      %235 = vperm.xlu0 %234, %v143
      %v236 = vpop.permute.xlu0 %235
      %v239 = vunpack.c.l.s4 1985246804
      %v240 = vunpack.c.0.s8 %v239
      %v241 = vlaneseq
      %v242 = vshrl.u32 %v241, 7
      %v243 = vsub.s32 %v240, %v242
      %v244 = vrot.slane %v236, %v243
      %vm245 = vcmp.eq.f32.partialorder %v233, %v244
      %v246 = vsel %vm245, 1, 0
      %v247 = vcvt.s32.f32 %v246
      %v248 = vmul.f32 %v232, %v247
      %v249 = vsel %vm219, %v248, 0.0
      %250 = vadd.xlane.f32.xlu0 %v249
      %v251 = vpop.xlane.xlu0 %250
      %v252 = vsel %vm171, %v251, 0.0
      %253 = vadd.xlane.f32.xlu0 %v252
      %v254 = vpop.xlane.xlu0 %253
      %v255 = vrot.slane %v254, 4
      %v256 = vadd.f32 %v254, %v255
      %v257 = vrot.slane %v256, 2
      %v258 = vadd.f32 %v256, %v257
      %v259 = vrot.slane %v258, 1
      %v260 = vadd.f32 %v258, %v259
      %s261 = vtos %v260
      %v262 = vstv %s261
      %v263 = vmul.f32 %v262, %v183
      %v264 = vsub.f32 0.0, %v263
      %266 = vrot.lane.b32.xlu0 %v247, 16
      %v267 = vpop.permute.xlu0 %266
      %v269 = vmul.f32 %v143, %v267
      %271 = vrot.lane.b32.xlu0 %v269, 112
      %v272 = vpop.permute.xlu0 %271
      %v274 = vsel %vm219, %v272, 0.0
      %275 = vadd.xlane.f32.xlu0 %v274
      %v276 = vpop.xlane.xlu0 %275
      %277 = vrot.lane.b32.xlu0 %v143, 103
      %v278 = vpop.permute.xlu0 %277
      %v279 = vrot.slane %v278, 4
      %v281 = vrcp.pop 0.2617994
      %v282 = vmul.f32 %v279, %v281
      %v283 = vsub.f32 %v276, %v282
      %v284 = vand.u32 2147483647, %v283
      %v285 = vmin.f32 %v284, 1.0
      %v286 = vsub.f32 %v284, %v285
      %v287 = vmul.f32 %v285, 0.5
      %v288 = vmul.f32 %v287, %v285
      %v289 = vadd.f32 %v288, %v286
      %v290 = vsel %vm171, %v289, 0.0
      %291 = vadd.xlane.f32.xlu0 %v290
      %v292 = vpop.xlane.xlu0 %291
      %v293 = vrot.slane %v292, 4
      %v294 = vadd.f32 %v292, %v293
      %v295 = vrot.slane %v294, 2
      %v296 = vadd.f32 %v294, %v295
      %v297 = vrot.slane %v296, 1
      %v298 = vadd.f32 %v296, %v297
      %s299 = vtos %v298
      %v300 = vstv %s299
      %v301 = vmul.f32 %v300, %v183
      %vm302 = vcmask 437632
      %v303 = vsel %vm302, %v143, -inf
      %304 = vmax.xlane.f32.xlu0 %v303
      %v305 = vpop.xlane.xlu0 %304
      %v306 = vsub.f32 %v143, %v305
      %v307 = vmul.f32 %v306, 1.442695
      %v308 = vpow.pop %v307
      %310 = vrot.lane.b32.xlu0 %v308, 80
      %v311 = vpop.permute.xlu0 %310
      %vm313 = vcmask 44032
      %v314 = vsel %vm313, %v311, 0.0
      %315 = vadd.xlane.f32.xlu0 %v314
      %v316 = vpop.xlane.xlu0 %315
      %v317 = vlog2.pop %v316
      %v318 = vmul.f32 %v317, 0.6931472
      %v319 = vadd.f32 %v305, %v318
      %v320 = vsub.f32 %v143, %v319
      %321 = vset.pattern.permute.xlu0 26
      %322 = vperm.xlu0 %321, %v143
      %v323 = vpop.permute.xlu0 %322
      %v326 = vunpack.c.l.s4 1985246804
      %v327 = vunpack.c.0.s8 %v326
      %v328 = vlaneseq
      %v329 = vshrl.u32 %v328, 7
      %v330 = vsub.s32 %v327, %v329
      %v331 = vrot.slane %v323, %v330
      %vm332 = vcmp.eq.f32.partialorder %v233, %v331
      %v333 = vsel %vm332, 1, 0
      %v334 = vcvt.s32.f32 %v333
      %336 = vrot.lane.b32.xlu0 %v334, 48
      %v337 = vpop.permute.xlu0 %336
      %v339 = vmul.f32 %v320, %v337
      %341 = vrot.lane.b32.xlu0 %v339, 80
      %v342 = vpop.permute.xlu0 %341
      %v344 = vsel %vm313, %v342, 0.0
      %345 = vadd.xlane.f32.xlu0 %v344
      %v346 = vpop.xlane.xlu0 %345
      %v347 = vsel %vm171, %v346, 0.0
      %348 = vadd.xlane.f32.xlu0 %v347
      %v349 = vpop.xlane.xlu0 %348
      %v350 = vrot.slane %v349, 4
      %v351 = vadd.f32 %v349, %v350
      %v352 = vrot.slane %v351, 2
      %v353 = vadd.f32 %v351, %v352
      %v354 = vrot.slane %v353, 1
      %v355 = vadd.f32 %v353, %v354
      %s356 = vtos %v355
      %v357 = vstv %s356
      %v358 = vmul.f32 %v357, %v183
      %v359 = vsub.f32 0.0, %v358
      %360 = vrot.lane.b32.xlu0 %v334, 56
      %v361 = vpop.permute.xlu0 %360
      %v363 = vmul.f32 %v143, %v361
      %365 = vrot.lane.b32.xlu0 %v363, 72
      %v366 = vpop.permute.xlu0 %365
      %v368 = vsel %vm313, %v366, 0.0
      %369 = vadd.xlane.f32.xlu0 %v368
      %v370 = vpop.xlane.xlu0 %369
      %371 = vrot.lane.b32.xlu0 %v334, 104
      %v372 = vpop.permute.xlu0 %371
      %v374 = vmul.f32 %v143, %v372
      %376 = vrot.lane.b32.xlu0 %v374, 24
      %v377 = vpop.permute.xlu0 %376
      %v379 = vsel %vm313, %v377, 0.0
      %380 = vadd.xlane.f32.xlu0 %v379
      %v381 = vpop.xlane.xlu0 %380
      %382 = vrot.lane.b32.xlu0 %v334, 80
      %v383 = vpop.permute.xlu0 %382
      %v385 = vmul.f32 %v143, %v383
      %387 = vrot.lane.b32.xlu0 %v385, 48
      %v388 = vpop.permute.xlu0 %387
      %v390 = vsel %vm313, %v388, 0.0
      %391 = vadd.xlane.f32.xlu0 %v390
      %v392 = vpop.xlane.xlu0 %391
      %393 = vrot.lane.b32.xlu0 %v143, 100
      %v394 = vpop.permute.xlu0 %393
      %v395 = vrot.slane %v394, 4
      %v397 = vrcp.pop %v381
      %v398 = vmul.f32 %v395, %v397
      %v399 = vsub.f32 %v398, %v370
      %v400 = vmul.f32 %v399, %v399
      %v401 = vadd.f32 %v400, 0.0
      %v402 = vmul.f32 %v392, 2.0
      %v403 = vadd.f32 %v381, %v402
      %v404 = vcombine.high %v143, %v143
      %405 = vrot.lane.b32.xlu0 %v404, 100
      %v406 = vpop.permute.xlu0 %405
      %v408 = vadd.f32 %v381, %v406
      %409 = vrot.lane.b32.xlu0 %v334, 64
      %v410 = vpop.permute.xlu0 %409
      %v412 = vmul.f32 %v143, %v410
      %414 = vrot.lane.b32.xlu0 %v412, 64
      %v415 = vpop.permute.xlu0 %414
      %v417 = vsel %vm313, %v415, 0.0
      %418 = vadd.xlane.f32.xlu0 %v417
      %v419 = vpop.xlane.xlu0 %418
      %420 = vrot.lane.b32.xlu0 %v334, 112
      %v421 = vpop.permute.xlu0 %420
      %v423 = vmul.f32 %v143, %v421
      %425 = vrot.lane.b32.xlu0 %v423, 16
      %v426 = vpop.permute.xlu0 %425
      %v428 = vsel %vm313, %v426, 0.0
      %429 = vadd.xlane.f32.xlu0 %v428
      %v430 = vpop.xlane.xlu0 %429
      %431 = vrot.lane.b32.xlu0 %v334, 88
      %v432 = vpop.permute.xlu0 %431
      %v434 = vmul.f32 %v143, %v432
      %436 = vrot.lane.b32.xlu0 %v434, 40
      %v437 = vpop.permute.xlu0 %436
      %v439 = vsel %vm313, %v437, 0.0
      %440 = vadd.xlane.f32.xlu0 %v439
      %v441 = vpop.xlane.xlu0 %440
      %442 = vrot.lane.b32.xlu0 %v143, 99
      %v443 = vpop.permute.xlu0 %442
      %v444 = vrot.slane %v443, 4
      %v446 = vrcp.pop %v430
      %v447 = vmul.f32 %v444, %v446
      %v448 = vsub.f32 %v447, %v419
      %v449 = vmul.f32 %v448, %v448
      %v450 = vadd.f32 %v401, %v449
      %v451 = vmul.f32 %v441, 2.0
      %v452 = vadd.f32 %v430, %v451
      %453 = vrot.lane.b32.xlu0 %v404, 99
      %v454 = vpop.permute.xlu0 %453
      %v456 = vadd.f32 %v430, %v454
      %457 = vrot.lane.b32.xlu0 %v334, 72
      %v458 = vpop.permute.xlu0 %457
      %v460 = vmul.f32 %v143, %v458
      %462 = vrot.lane.b32.xlu0 %v460, 56
      %v463 = vpop.permute.xlu0 %462
      %v465 = vsel %vm313, %v463, 0.0
      %466 = vadd.xlane.f32.xlu0 %v465
      %v467 = vpop.xlane.xlu0 %466
      %468 = vrot.lane.b32.xlu0 %v334, 120
      %v469 = vpop.permute.xlu0 %468
      %v471 = vmul.f32 %v143, %v469
      %473 = vrot.lane.b32.xlu0 %v471, 8
      %v474 = vpop.permute.xlu0 %473
      %v476 = vsel %vm313, %v474, 0.0
      %477 = vadd.xlane.f32.xlu0 %v476
      %v478 = vpop.xlane.xlu0 %477
      %479 = vrot.lane.b32.xlu0 %v334, 96
      %v480 = vpop.permute.xlu0 %479
      %v482 = vmul.f32 %v143, %v480
      %484 = vrot.lane.b32.xlu0 %v482, 32
      %v485 = vpop.permute.xlu0 %484
      %v487 = vsel %vm313, %v485, 0.0
      %488 = vadd.xlane.f32.xlu0 %v487
      %v489 = vpop.xlane.xlu0 %488
      %490 = vrot.lane.b32.xlu0 %v143, 98
      %v491 = vpop.permute.xlu0 %490
      %v492 = vrot.slane %v491, 4
      %v494 = vrcp.pop %v478
      %v495 = vmul.f32 %v492, %v494
      %v496 = vsub.f32 %v495, %v467
      %v497 = vmul.f32 %v496, %v496
      %v498 = vadd.f32 %v450, %v497
      %v499 = vmul.f32 %v489, 2.0
      %v500 = vadd.f32 %v478, %v499
      %501 = vrot.lane.b32.xlu0 %v404, 98
      %v502 = vpop.permute.xlu0 %501
      %v504 = vadd.f32 %v478, %v502
      %v505 = vrsqrt.pop %v498
      %v506 = vmul.f32 %v498, %v505
      %vm507 = vcmp.eq.f32.partialorder %v498, inf
      %v508 = vsel %vm507, %v498, %v506
      %vm509 = vcmp.eq.f32.partialorder %v498, 0.0
      %v510 = vand.u32 %v498, 2147483648
      %v511 = vsel %vm509, %v510, %v508
      %v512 = vand.u32 2147483647, %v511
      %v513 = vmin.f32 %v512, 1.0
      %v514 = vsub.f32 %v512, %v513
      %v515 = vmul.f32 %v513, 0.5
      %v516 = vmul.f32 %v515, %v513
      %v517 = vadd.f32 %v516, %v514
      %v518 = vsel %vm171, %v517, 0.0
      %519 = vadd.xlane.f32.xlu0 %v518
      %v520 = vpop.xlane.xlu0 %519
      %v521 = vrot.slane %v520, 4
      %v522 = vadd.f32 %v520, %v521
      %v523 = vrot.slane %v522, 2
      %v524 = vadd.f32 %v522, %v523
      %v525 = vrot.slane %v524, 1
      %v526 = vadd.f32 %v524, %v525
      %s527 = vtos %v526
      %v528 = vstv %s527
      %v529 = vmul.f32 %v528, %v183
      %v530 = vmul.f32 %v233, 0.5235988
      %532 = vrot.lane.b32.xlu0 %v530, 32
      %v533 = vpop.permute.xlu0 %532
      %v535 = vadd.f32 %v143, %v533
      %537 = vrot.lane.b32.xlu0 %v535, 96
      %v538 = vpop.permute.xlu0 %537
      %v540 = vmul.f32 %v247, %v538
      %v541 = vsel %vm219, %v540, 0.0
      %542 = vadd.xlane.f32.xlu0 %v541
      %v543 = vpop.xlane.xlu0 %542
      %544 = vset.pattern.permute.xlu0 25
      %545 = vperm.xlu0 %544, %v143
      %v546 = vpop.permute.xlu0 %545
      %v549 = vunpack.c.l.s4 1985246804
      %v550 = vunpack.c.0.s8 %v549
      %v551 = vlaneseq
      %v552 = vshrl.u32 %v551, 7
      %v553 = vsub.s32 %v550, %v552
      %v554 = vrot.slane %v546, %v553
      %v555 = vadd.f32 %v554, %v530
      %v556 = vmul.f32 %v247, %v555
      %v557 = vsel %vm219, %v556, 0.0
      %558 = vadd.xlane.f32.xlu0 %v557
      %v559 = vpop.xlane.xlu0 %558
      %vm560 = vcmp.lt.s32.totalorder %v83, 0
      %v561 = vsub.s32 0, %v83
      %v562 = vsel %vm560, %v561, %v83
      %v563 = vshrl.u32 %v562, 2
      %v564 = vand.u32 %v562, 3
      %v565 = vsub.s32 0, %v564
      %v566 = vsel %vm560, %v565, %v564
      %vm567 = vcmp.ne.s32.totalorder %v566, 0
      %vm568 = vcmp.lt.s32.totalorder %v566, 0
      %vm569 = vmand %vm568, %vm567
      %v570 = vadd.s32 %v566, 4
      %v571 = vsel %vm569, %v570, %v566
      %vm572 = vcmp.lt.s32.totalorder %v571, 2
      %v573 = vsel %vm572, 1.0, -1.0
      %vm574 = vcmp.lt.s32.totalorder %v83, 4
      %v575 = vsel %vm574, 1.0, -1.0
      %vm576 = vcmp.eq.s32.totalorder %v571, 0
      %vm577 = vcmp.eq.s32.totalorder %v571, 3
      %vm578 = vmor %vm576, %vm577
      %v579 = vsel %vm578, 1.0, -1.0
      %v580 = vmul.f32 %v403, 0.5
      %v581 = vmul.f32 %v580, %v573
      %v582 = vmul.f32 %v500, 0.5
      %v583 = vmul.f32 %v582, %v575
      %v584 = vmul.f32 %v452, 0.5
      %v585 = vmul.f32 %v584, %v579
      %v586 = vand.u32 2147483647, %v543
      %vm587 = vcmp.le.f32.partialorder %v586, 0.7853982
      %vm588 = vcmp.lt.s32.totalorder %v543, 0
      %v589 = vand.u32 %v543, 2139095040
      %v590 = vshrl.u32 %v589, 23
      %v591 = vsub.s32 %v590, 127
      %v592 = vand.u32 2147483647, %v543
      %v593 = vand.u32 %v592, 8388607
      %v594 = vor.u32 %v593, 8388608
      %v595 = vsub.s32 0, %v594
      %v596 = vadd.s32 %v591, 1
      %vm597 = vcmp.gt.s32.totalorder %v596, 0
      %v598 = vsel %vm597, %v596, 0
      %v599 = vshrl.u32 %v598, 5
      %v600 = vand.u32 %v598, 31
      %v601 = vsub.s32 32, %v600
      %v602 = vshrl.u32 683565275, %v601
      %v603 = vshll.u32 683565275, %v600
      %v604 = vshrl.u32 2475754826, %v601
      %v605 = vor.u32 %v603, %v604
      %v606 = vshll.u32 2475754826, %v600
      %v607 = vshrl.u32 2131351028, %v601
      %v608 = vor.u32 %v606, %v607
      %v609 = vshll.u32 2131351028, %v600
      %v610 = vshrl.u32 2102212464, %v601
      %v611 = vor.u32 %v609, %v610
      %v612 = vshll.u32 2102212464, %v600
      %v613 = vshrl.u32 920167782, %v601
      %v614 = vor.u32 %v612, %v613
      %v615 = vshll.u32 920167782, %v600
      %v616 = vshrl.u32 1326507024, %v601
      %v617 = vor.u32 %v615, %v616
      %vm618 = vcmp.lt.s32.totalorder %v599, 1
      %vm619 = vcmp.lt.s32.totalorder %v599, 2
      %vm620 = vcmp.lt.s32.totalorder %v599, 3
      %vm621 = vcmp.lt.s32.totalorder %v599, 4
      %v622 = vsel %vm618, %v602, %v605
      %v623 = vsel %vm621, %v611, 2102212464
      %v624 = vsel %vm620, %v608, %v623
      %v625 = vsel %vm619, %v622, %v624
      %v626 = vsel %vm618, %v605, %v608
      %v627 = vsel %vm621, %v614, 920167782
      %v628 = vsel %vm620, %v611, %v627
      %v629 = vsel %vm619, %v626, %v628
      %v630 = vsel %vm618, %v608, %v611
      %v631 = vsel %vm621, %v617, 1326507024
      %v632 = vsel %vm620, %v614, %v631
      %v633 = vsel %vm619, %v630, %v632
      %v634 = vshll.u32 %v594, 8
      %v635 = vmul.u32.u64.compose %v634, %v633
      %v636 = vextract.low.u32 %v635
      %v637 = vextract.high.u32 %v635
      %v638 = vmul.u32.u64.compose %v634, %v629
      %v639 = vextract.low.u32 %v638
      %v640 = vextract.high.u32 %v638
      %v641 = vmul.u32 %v634, %v625
      %v642 = vadd.s32 %v637, %v639
      %vm643 = vc.u32 %v637, %v639
      %v644 = vadd.s32 %v640, 1
      %v645 = vsel %vm643, %v644, %v640
      %v646 = vadd.s32 %v641, %v645
      %v647 = vadd.s32 %v646, 536870912
      %v648 = vshrl.u32 %v647, 30
      %v649 = vshll.u32 %v648, 30
      %v650 = vsub.s32 %v646, %v649
      %vm651 = vcmp.lt.s32.totalorder %v650, 0
      %v652 = vsub.s32 0, %v650
      %v653 = vsel %vm651, %v652, %v650
      %v654 = vclz %v653
      %v655 = vsub.s32 %v654, 2
      %vm656 = vcmp.gt.s32.totalorder 0, %v655
      %v657 = vsel %vm656, 0, %v655
      %v658 = vsub.s32 32, %v657
      %v659 = vshll.u32 %v650, %v657
      %v660 = vshrl.u32 %v642, %v658
      %v661 = vor.u32 %v659, %v660
      %v662 = vsub.s32 4294967266, %v657
      %v663 = vadd.s32 %v662, 127
      %v664 = vshll.u32 %v663, 23
      %v665 = vor.u32 4788187, %v664
      %v666 = vand.u32 2147483647, %v665
      %v668 = vcvt.s32.f32 %v661
      %v669 = vmul.f32 %v668, %v666
      %v670 = vxor.u32 %v669, 2147483648
      %v671 = vsel %vm588, %v670, %v669
      %v672 = vsub.s32 4, %v648
      %v673 = vsel %vm588, %v672, %v648
      %v674 = vsel %vm587, %v543, %v671
      %v675 = vsel %vm587, 0, %v673
      %v676 = vcosq.f32.pop %v674
      %v677 = vsinq.f32.pop %v674
      %vm678 = vweird.f32 %v543
      %v679 = vand.u32 %v675, 3
      %vm680 = vcmp.lt.s32.totalorder %v679, 2
      %vm681 = vcmp.eq.s32.totalorder %v679, 0
      %v682 = vxor.u32 %v677, 2147483648
      %v683 = vsel %vm681, %v676, %v682
      %vm684 = vcmp.eq.s32.totalorder %v679, 2
      %v685 = vxor.u32 %v676, 2147483648
      %v686 = vsel %vm684, %v685, %v677
      %v687 = vsel %vm680, %v683, %v686
      %v688 = vsel %vm678, nan, %v687
      %v689 = vand.u32 2147483647, %v543
      %vm690 = vcmp.le.f32.partialorder %v689, 0.7853982
      %vm691 = vcmp.lt.s32.totalorder %v543, 0
      %v692 = vand.u32 %v543, 2139095040
      %v693 = vshrl.u32 %v692, 23
      %v694 = vsub.s32 %v693, 127
      %v695 = vand.u32 2147483647, %v543
      %v696 = vand.u32 %v695, 8388607
      %v697 = vor.u32 %v696, 8388608
      %v698 = vsub.s32 0, %v697
      %v699 = vadd.s32 %v694, 1
      %vm700 = vcmp.gt.s32.totalorder %v699, 0
      %v701 = vsel %vm700, %v699, 0
      %v702 = vshrl.u32 %v701, 5
      %v703 = vand.u32 %v701, 31
      %v704 = vsub.s32 32, %v703
      %v705 = vshrl.u32 683565275, %v704
      %v706 = vshll.u32 683565275, %v703
      %v707 = vshrl.u32 2475754826, %v704
      %v708 = vor.u32 %v706, %v707
      %v709 = vshll.u32 2475754826, %v703
      %v710 = vshrl.u32 2131351028, %v704
      %v711 = vor.u32 %v709, %v710
      %v712 = vshll.u32 2131351028, %v703
      %v713 = vshrl.u32 2102212464, %v704
      %v714 = vor.u32 %v712, %v713
      %v715 = vshll.u32 2102212464, %v703
      %v716 = vshrl.u32 920167782, %v704
      %v717 = vor.u32 %v715, %v716
      %v718 = vshll.u32 920167782, %v703
      %v719 = vshrl.u32 1326507024, %v704
      %v720 = vor.u32 %v718, %v719
      %vm721 = vcmp.lt.s32.totalorder %v702, 1
      %vm722 = vcmp.lt.s32.totalorder %v702, 2
      %vm723 = vcmp.lt.s32.totalorder %v702, 3
      %vm724 = vcmp.lt.s32.totalorder %v702, 4
      %v725 = vsel %vm721, %v705, %v708
      %v726 = vsel %vm724, %v714, 2102212464
      %v727 = vsel %vm723, %v711, %v726
      %v728 = vsel %vm722, %v725, %v727
      %v729 = vsel %vm721, %v708, %v711
      %v730 = vsel %vm724, %v717, 920167782
      %v731 = vsel %vm723, %v714, %v730
      %v732 = vsel %vm722, %v729, %v731
      %v733 = vsel %vm721, %v711, %v714
      %v734 = vsel %vm724, %v720, 1326507024
      %v735 = vsel %vm723, %v717, %v734
      %v736 = vsel %vm722, %v733, %v735
      %v737 = vshll.u32 %v697, 8
      %v738 = vmul.u32.u64.compose %v737, %v736
      %v739 = vextract.low.u32 %v738
      %v740 = vextract.high.u32 %v738
      %v741 = vmul.u32.u64.compose %v737, %v732
      %v742 = vextract.low.u32 %v741
      %v743 = vextract.high.u32 %v741
      %v744 = vmul.u32 %v737, %v728
      %v745 = vadd.s32 %v740, %v742
      %vm746 = vc.u32 %v740, %v742
      %v747 = vadd.s32 %v743, 1
      %v748 = vsel %vm746, %v747, %v743
      %v749 = vadd.s32 %v744, %v748
      %v750 = vadd.s32 %v749, 536870912
      %v751 = vshrl.u32 %v750, 30
      %v752 = vshll.u32 %v751, 30
      %v753 = vsub.s32 %v749, %v752
      %vm754 = vcmp.lt.s32.totalorder %v753, 0
      %v755 = vsub.s32 0, %v753
      %v756 = vsel %vm754, %v755, %v753
      %v757 = vclz %v756
      %v758 = vsub.s32 %v757, 2
      %vm759 = vcmp.gt.s32.totalorder 0, %v758
      %v760 = vsel %vm759, 0, %v758
      %v761 = vsub.s32 32, %v760
      %v762 = vshll.u32 %v753, %v760
      %v763 = vshrl.u32 %v745, %v761
      %v764 = vor.u32 %v762, %v763
      %v765 = vsub.s32 4294967266, %v760
      %v766 = vadd.s32 %v765, 127
      %v767 = vshll.u32 %v766, 23
      %v768 = vor.u32 4788187, %v767
      %v769 = vand.u32 2147483647, %v768
      %v771 = vcvt.s32.f32 %v764
      %v772 = vmul.f32 %v771, %v769
      %v773 = vxor.u32 %v772, 2147483648
      %v774 = vsel %vm691, %v773, %v772
      %v775 = vsub.s32 4, %v751
      %v776 = vsel %vm691, %v775, %v751
      %v777 = vsel %vm690, %v543, %v774
      %v778 = vsel %vm690, 0, %v776
      %v779 = vcosq.f32.pop %v777
      %v780 = vsinq.f32.pop %v777
      %vm781 = vweird.f32 %v543
      %v782 = vadd.s32 %v778, 3
      %v783 = vand.u32 %v782, 3
      %vm784 = vcmp.lt.s32.totalorder %v783, 2
      %vm785 = vcmp.eq.s32.totalorder %v783, 0
      %v786 = vxor.u32 %v780, 2147483648
      %v787 = vsel %vm785, %v779, %v786
      %vm788 = vcmp.eq.s32.totalorder %v783, 2
      %v789 = vxor.u32 %v779, 2147483648
      %v790 = vsel %vm788, %v789, %v780
      %v791 = vsel %vm784, %v787, %v790
      %v792 = vsel %vm781, nan, %v791
      %v793 = vmul.f32 %v688, %v581
      %v794 = vmul.f32 %v792, %v585
      %v795 = vadd.f32 %v793, %v794
      %796 = vset.pattern.permute.xlu0 0
      %797 = vperm.xlu0 %796, %v143
      %v798 = vpop.permute.xlu0 %797
      %v801 = vunpack.c.l.s4 1985246804
      %v802 = vunpack.c.0.s8 %v801
      %v803 = vlaneseq
      %v804 = vshrl.u32 %v803, 7
      %v805 = vsub.s32 %v802, %v804
      %v806 = vrot.slane %v798, %v805
      %v807 = vadd.f32 %v795, %v806
      %808 = vset.pattern.permute.xlu0 1
      %809 = vperm.xlu0 %808, %v143
      %v810 = vpop.permute.xlu0 %809
      %v813 = vunpack.c.l.s4 1985246804
      %v814 = vunpack.c.0.s8 %v813
      %v815 = vlaneseq
      %v816 = vshrl.u32 %v815, 7
      %v817 = vsub.s32 %v814, %v816
      %v818 = vrot.slane %v810, %v817
      %v819 = vadd.f32 %v583, %v818
      %v820 = vsub.f32 0.0, %v792
      %v821 = vmul.f32 %v820, %v581
      %v822 = vmul.f32 %v688, %v585
      %v823 = vadd.f32 %v821, %v822
      %824 = vset.pattern.permute.xlu0 2
      %825 = vperm.xlu0 %824, %v143
      %v826 = vpop.permute.xlu0 %825
      %v829 = vunpack.c.l.s4 1985246804
      %v830 = vunpack.c.0.s8 %v829
      %v831 = vlaneseq
      %v832 = vshrl.u32 %v831, 7
      %v833 = vsub.s32 %v830, %v832
      %v834 = vrot.slane %v826, %v833
      %v835 = vadd.f32 %v823, %v834
      %v836 = vmul.f32 %v408, 0.5
      %838 = vset.pattern.permute.xlu0 0
      %839 = vperm.xlu0 %838, %v836
      %v840 = vpop.permute.xlu0 %839
      %v842 = vmul.f32 %v840, %v573
      %v843 = vmul.f32 %v504, 0.5
      %845 = vset.pattern.permute.xlu0 0
      %846 = vperm.xlu0 %845, %v843
      %v847 = vpop.permute.xlu0 %846
      %v849 = vmul.f32 %v847, %v575
      %v850 = vmul.f32 %v456, 0.5
      %852 = vset.pattern.permute.xlu0 0
      %853 = vperm.xlu0 %852, %v850
      %v854 = vpop.permute.xlu0 %853
      %v856 = vmul.f32 %v854, %v579
      %v857 = vand.u32 2147483647, %v559
      %vm858 = vcmp.le.f32.partialorder %v857, 0.7853982
      %vm859 = vcmp.lt.s32.totalorder %v559, 0
      %v860 = vand.u32 %v559, 2139095040
      %v861 = vshrl.u32 %v860, 23
      %v862 = vsub.s32 %v861, 127
      %v863 = vand.u32 2147483647, %v559
      %v864 = vand.u32 %v863, 8388607
      %v865 = vor.u32 %v864, 8388608
      %v866 = vsub.s32 0, %v865
      %v867 = vadd.s32 %v862, 1
      %vm868 = vcmp.gt.s32.totalorder %v867, 0
      %v869 = vsel %vm868, %v867, 0
      %v870 = vshrl.u32 %v869, 5
      %v871 = vand.u32 %v869, 31
      %v872 = vsub.s32 32, %v871
      %v873 = vshrl.u32 683565275, %v872
      %v874 = vshll.u32 683565275, %v871
      %v875 = vshrl.u32 2475754826, %v872
      %v876 = vor.u32 %v874, %v875
      %v877 = vshll.u32 2475754826, %v871
      %v878 = vshrl.u32 2131351028, %v872
      %v879 = vor.u32 %v877, %v878
      %v880 = vshll.u32 2131351028, %v871
      %v881 = vshrl.u32 2102212464, %v872
      %v882 = vor.u32 %v880, %v881
      %v883 = vshll.u32 2102212464, %v871
      %v884 = vshrl.u32 920167782, %v872
      %v885 = vor.u32 %v883, %v884
      %v886 = vshll.u32 920167782, %v871
      %v887 = vshrl.u32 1326507024, %v872
      %v888 = vor.u32 %v886, %v887
      %vm889 = vcmp.lt.s32.totalorder %v870, 1
      %vm890 = vcmp.lt.s32.totalorder %v870, 2
      %vm891 = vcmp.lt.s32.totalorder %v870, 3
      %vm892 = vcmp.lt.s32.totalorder %v870, 4
      %v893 = vsel %vm889, %v873, %v876
      %v894 = vsel %vm892, %v882, 2102212464
      %v895 = vsel %vm891, %v879, %v894
      %v896 = vsel %vm890, %v893, %v895
      %v897 = vsel %vm889, %v876, %v879
      %v898 = vsel %vm892, %v885, 920167782
      %v899 = vsel %vm891, %v882, %v898
      %v900 = vsel %vm890, %v897, %v899
      %v901 = vsel %vm889, %v879, %v882
      %v902 = vsel %vm892, %v888, 1326507024
      %v903 = vsel %vm891, %v885, %v902
      %v904 = vsel %vm890, %v901, %v903
      %v905 = vshll.u32 %v865, 8
      %v906 = vmul.u32.u64.compose %v905, %v904
      %v907 = vextract.low.u32 %v906
      %v908 = vextract.high.u32 %v906
      %v909 = vmul.u32.u64.compose %v905, %v900
      %v910 = vextract.low.u32 %v909
      %v911 = vextract.high.u32 %v909
      %v912 = vmul.u32 %v905, %v896
      %v913 = vadd.s32 %v908, %v910
      %vm914 = vc.u32 %v908, %v910
      %v915 = vadd.s32 %v911, 1
      %v916 = vsel %vm914, %v915, %v911
      %v917 = vadd.s32 %v912, %v916
      %v918 = vadd.s32 %v917, 536870912
      %v919 = vshrl.u32 %v918, 30
      %v920 = vshll.u32 %v919, 30
      %v921 = vsub.s32 %v917, %v920
      %vm922 = vcmp.lt.s32.totalorder %v921, 0
      %v923 = vsub.s32 0, %v921
      %v924 = vsel %vm922, %v923, %v921
      %v925 = vclz %v924
      %v926 = vsub.s32 %v925, 2
      %vm927 = vcmp.gt.s32.totalorder 0, %v926
      %v928 = vsel %vm927, 0, %v926
      %v929 = vsub.s32 32, %v928
      %v930 = vshll.u32 %v921, %v928
      %v931 = vshrl.u32 %v913, %v929
      %v932 = vor.u32 %v930, %v931
      %v933 = vsub.s32 4294967266, %v928
      %v934 = vadd.s32 %v933, 127
      %v935 = vshll.u32 %v934, 23
      %v936 = vor.u32 4788187, %v935
      %v937 = vand.u32 2147483647, %v936
      %v939 = vcvt.s32.f32 %v932
      %v940 = vmul.f32 %v939, %v937
      %v941 = vxor.u32 %v940, 2147483648
      %v942 = vsel %vm859, %v941, %v940
      %v943 = vsub.s32 4, %v919
      %v944 = vsel %vm859, %v943, %v919
      %v945 = vsel %vm858, %v559, %v942
      %v946 = vsel %vm858, 0, %v944
      %v947 = vcosq.f32.pop %v945
      %v948 = vsinq.f32.pop %v945
      %vm949 = vweird.f32 %v559
      %v950 = vand.u32 %v946, 3
      %vm951 = vcmp.lt.s32.totalorder %v950, 2
      %vm952 = vcmp.eq.s32.totalorder %v950, 0
      %v953 = vxor.u32 %v948, 2147483648
      %v954 = vsel %vm952, %v947, %v953
      %vm955 = vcmp.eq.s32.totalorder %v950, 2
      %v956 = vxor.u32 %v947, 2147483648
      %v957 = vsel %vm955, %v956, %v948
      %v958 = vsel %vm951, %v954, %v957
      %v959 = vsel %vm949, nan, %v958
      %v960 = vand.u32 2147483647, %v559
      %vm961 = vcmp.le.f32.partialorder %v960, 0.7853982
      %vm962 = vcmp.lt.s32.totalorder %v559, 0
      %v963 = vand.u32 %v559, 2139095040
      %v964 = vshrl.u32 %v963, 23
      %v965 = vsub.s32 %v964, 127
      %v966 = vand.u32 2147483647, %v559
      %v967 = vand.u32 %v966, 8388607
      %v968 = vor.u32 %v967, 8388608
      %v969 = vsub.s32 0, %v968
      %v970 = vadd.s32 %v965, 1
      %vm971 = vcmp.gt.s32.totalorder %v970, 0
      %v972 = vsel %vm971, %v970, 0
      %v973 = vshrl.u32 %v972, 5
      %v974 = vand.u32 %v972, 31
      %v975 = vsub.s32 32, %v974
      %v976 = vshrl.u32 683565275, %v975
      %v977 = vshll.u32 683565275, %v974
      %v978 = vshrl.u32 2475754826, %v975
      %v979 = vor.u32 %v977, %v978
      %v980 = vshll.u32 2475754826, %v974
      %v981 = vshrl.u32 2131351028, %v975
      %v982 = vor.u32 %v980, %v981
      %v983 = vshll.u32 2131351028, %v974
      %v984 = vshrl.u32 2102212464, %v975
      %v985 = vor.u32 %v983, %v984
      %v986 = vshll.u32 2102212464, %v974
      %v987 = vshrl.u32 920167782, %v975
      %v988 = vor.u32 %v986, %v987
      %v989 = vshll.u32 920167782, %v974
      %v990 = vshrl.u32 1326507024, %v975
      %v991 = vor.u32 %v989, %v990
      %vm992 = vcmp.lt.s32.totalorder %v973, 1
      %vm993 = vcmp.lt.s32.totalorder %v973, 2
      %vm994 = vcmp.lt.s32.totalorder %v973, 3
      %vm995 = vcmp.lt.s32.totalorder %v973, 4
      %v996 = vsel %vm992, %v976, %v979
      %v997 = vsel %vm995, %v985, 2102212464
      %v998 = vsel %vm994, %v982, %v997
      %v999 = vsel %vm993, %v996, %v998
      %v1000 = vsel %vm992, %v979, %v982
      %v1001 = vsel %vm995, %v988, 920167782
      %v1002 = vsel %vm994, %v985, %v1001
      %v1003 = vsel %vm993, %v1000, %v1002
      %v1004 = vsel %vm992, %v982, %v985
      %v1005 = vsel %vm995, %v991, 1326507024
      %v1006 = vsel %vm994, %v988, %v1005
      %v1007 = vsel %vm993, %v1004, %v1006
      %v1008 = vshll.u32 %v968, 8
      %v1009 = vmul.u32.u64.compose %v1008, %v1007
      %v1010 = vextract.low.u32 %v1009
      %v1011 = vextract.high.u32 %v1009
      %v1012 = vmul.u32.u64.compose %v1008, %v1003
      %v1013 = vextract.low.u32 %v1012
      %v1014 = vextract.high.u32 %v1012
      %v1015 = vmul.u32 %v1008, %v999
      %v1016 = vadd.s32 %v1011, %v1013
      %vm1017 = vc.u32 %v1011, %v1013
      %v1018 = vadd.s32 %v1014, 1
      %v1019 = vsel %vm1017, %v1018, %v1014
      %v1020 = vadd.s32 %v1015, %v1019
      %v1021 = vadd.s32 %v1020, 536870912
      %v1022 = vshrl.u32 %v1021, 30
      %v1023 = vshll.u32 %v1022, 30
      %v1024 = vsub.s32 %v1020, %v1023
      %vm1025 = vcmp.lt.s32.totalorder %v1024, 0
      %v1026 = vsub.s32 0, %v1024
      %v1027 = vsel %vm1025, %v1026, %v1024
      %v1028 = vclz %v1027
      %v1029 = vsub.s32 %v1028, 2
      %vm1030 = vcmp.gt.s32.totalorder 0, %v1029
      %v1031 = vsel %vm1030, 0, %v1029
      %v1032 = vsub.s32 32, %v1031
      %v1033 = vshll.u32 %v1024, %v1031
      %v1034 = vshrl.u32 %v1016, %v1032
      %v1035 = vor.u32 %v1033, %v1034
      %v1036 = vsub.s32 4294967266, %v1031
      %v1037 = vadd.s32 %v1036, 127
      %v1038 = vshll.u32 %v1037, 23
      %v1039 = vor.u32 4788187, %v1038
      %v1040 = vand.u32 2147483647, %v1039
      %v1042 = vcvt.s32.f32 %v1035
      %v1043 = vmul.f32 %v1042, %v1040
      %v1044 = vxor.u32 %v1043, 2147483648
      %v1045 = vsel %vm962, %v1044, %v1043
      %v1046 = vsub.s32 4, %v1022
      %v1047 = vsel %vm962, %v1046, %v1022
      %v1048 = vsel %vm961, %v559, %v1045
      %v1049 = vsel %vm961, 0, %v1047
      %v1050 = vcosq.f32.pop %v1048
      %v1051 = vsinq.f32.pop %v1048
      %vm1052 = vweird.f32 %v559
      %v1053 = vadd.s32 %v1049, 3
      %v1054 = vand.u32 %v1053, 3
      %vm1055 = vcmp.lt.s32.totalorder %v1054, 2
      %vm1056 = vcmp.eq.s32.totalorder %v1054, 0
      %v1057 = vxor.u32 %v1051, 2147483648
      %v1058 = vsel %vm1056, %v1050, %v1057
      %vm1059 = vcmp.eq.s32.totalorder %v1054, 2
      %v1060 = vxor.u32 %v1050, 2147483648
      %v1061 = vsel %vm1059, %v1060, %v1051
      %v1062 = vsel %vm1055, %v1058, %v1061
      %v1063 = vsel %vm1052, nan, %v1062
      %v1064 = vmul.f32 %v959, %v842
      %v1065 = vmul.f32 %v1063, %v856
      %v1066 = vadd.f32 %v1064, %v1065
      %1067 = vset.pattern.permute.xlu0 8
      %1068 = vperm.xlu0 %1067, %v143
      %v1069 = vpop.permute.xlu0 %1068
      %v1072 = vunpack.c.l.s4 1985246804
      %v1073 = vunpack.c.0.s8 %v1072
      %v1074 = vlaneseq
      %v1075 = vshrl.u32 %v1074, 7
      %v1076 = vsub.s32 %v1073, %v1075
      %v1077 = vrot.slane %v1069, %v1076
      %v1078 = vadd.f32 %v1066, %v1077
      %1079 = vset.pattern.permute.xlu0 9
      %1080 = vperm.xlu0 %1079, %v143
      %v1081 = vpop.permute.xlu0 %1080
      %v1084 = vunpack.c.l.s4 1985246804
      %v1085 = vunpack.c.0.s8 %v1084
      %v1086 = vlaneseq
      %v1087 = vshrl.u32 %v1086, 7
      %v1088 = vsub.s32 %v1085, %v1087
      %v1089 = vrot.slane %v1081, %v1088
      %v1090 = vadd.f32 %v849, %v1089
      %v1091 = vsub.f32 0.0, %v1063
      %v1092 = vmul.f32 %v1091, %v842
      %v1093 = vmul.f32 %v959, %v856
      %v1094 = vadd.f32 %v1092, %v1093
      %1095 = vset.pattern.permute.xlu0 10
      %1096 = vperm.xlu0 %1095, %v143
      %v1097 = vpop.permute.xlu0 %1096
      %v1100 = vunpack.c.l.s4 1985246804
      %v1101 = vunpack.c.0.s8 %v1100
      %v1102 = vlaneseq
      %v1103 = vshrl.u32 %v1102, 7
      %v1104 = vsub.s32 %v1101, %v1103
      %v1105 = vrot.slane %v1097, %v1104
      %v1106 = vadd.f32 %v1094, %v1105
      %v1107 = vmul.f32 %v149, 2.0
      %1109 = vset.pattern.permute.xlu0 0
      %1110 = vperm.xlu0 %1109, %v1107
      %v1111 = vpop.permute.xlu0 %1110
      %v1114 = vunpack.c.l.s4 839922192
      %v1115 = vunpack.c.0.s8 %v1114
      %v1116 = vlaneseq
      %v1117 = vshrl.u32 %v1116, 7
      %v1118 = vsub.s32 %v1115, %v1117
      %v1119 = vrot.slane %v1111, %v1118
      %v1120 = vsub.f32 %v1119, %v1078
      %1121 = vrot.lane.b32.xlu0 %v143, 118
      %v1122 = vpop.permute.xlu0 %1121
      %v1123 = vrot.slane %v1122, 4
      %v1125 = vmul.f32 %v1123, 2.0
      %1127 = vset.pattern.permute.xlu0 0
      %1128 = vperm.xlu0 %1127, %v1125
      %v1129 = vpop.permute.xlu0 %1128
      %v1132 = vunpack.c.l.s4 839922192
      %v1133 = vunpack.c.0.s8 %v1132
      %v1134 = vlaneseq
      %v1135 = vshrl.u32 %v1134, 7
      %v1136 = vsub.s32 %v1133, %v1135
      %v1137 = vrot.slane %v1129, %v1136
      %v1138 = vsub.f32 %v1137, %v1106
      %v1139 = vsub.f32 %v807, %v1078
      %v1140 = vsub.f32 %v819, %v1090
      %v1141 = vsub.f32 %v835, %v1106
      %v1142 = vmul.f32 %v1139, %v1139
      %v1143 = vmul.f32 %v1140, %v1140
      %v1144 = vadd.f32 %v1142, %v1143
      %v1145 = vmul.f32 %v1141, %v1141
      %v1146 = vadd.f32 %v1144, %v1145
      %v1147 = vrsqrt.pop %v1146
      %v1148 = vmul.f32 %v1146, %v1147
      %vm1149 = vcmp.eq.f32.partialorder %v1146, inf
      %v1150 = vsel %vm1149, %v1146, %v1148
      %vm1151 = vcmp.eq.f32.partialorder %v1146, 0.0
      %v1152 = vand.u32 %v1146, 2147483648
      %v1153 = vsel %vm1151, %v1152, %v1150
      %v1154 = vsub.f32 %v807, %v1120
      %v1155 = vsub.f32 %v835, %v1138
      %v1156 = vmul.f32 %v1154, %v1154
      %v1157 = vadd.f32 %v1156, %v1143
      %v1158 = vmul.f32 %v1155, %v1155
      %v1159 = vadd.f32 %v1157, %v1158
      %v1160 = vrsqrt.pop %v1159
      %v1161 = vmul.f32 %v1159, %v1160
      %vm1162 = vcmp.eq.f32.partialorder %v1159, inf
      %v1163 = vsel %vm1162, %v1159, %v1161
      %vm1164 = vcmp.eq.f32.partialorder %v1159, 0.0
      %v1165 = vand.u32 %v1159, 2147483648
      %v1166 = vsel %vm1164, %v1165, %v1163
      %v1167 = vmin.f32 %v1153, %v1166
      %v1168 = vand.u32 2147483647, %v1167
      %v1169 = vmin.f32 %v1168, 1.0
      %v1170 = vsub.f32 %v1168, %v1169
      %v1171 = vmul.f32 %v1169, 0.5
      %v1172 = vmul.f32 %v1171, %v1169
      %v1173 = vadd.f32 %v1172, %v1170
      %vm1174 = vcmask 60416
      %v1175 = vsel %vm1174, %v1173, 0.0
      %1176 = vadd.xlane.f32.xlu0 %v1175
      %v1177 = vpop.xlane.xlu0 %1176
      %v1178 = vrot.slane %v1177, 4
      %v1179 = vadd.f32 %v1177, %v1178
      %v1180 = vrot.slane %v1179, 2
      %v1181 = vadd.f32 %v1179, %v1180
      %v1182 = vrot.slane %v1181, 1
      %v1183 = vadd.f32 %v1181, %v1182
      %s1184 = vtos %v1183
      %v1185 = vstv %s1184
      %v1186 = vrcp.pop 32.0
      %v1187 = vmul.f32 %v1185, %v1186
      %v1188 = vadd.f32 %v184, %v264
      %v1189 = vadd.f32 %v1188, %v359
      %v1190 = vmul.f32 %v301, 20.0
      %v1191 = vadd.f32 %v1189, %v1190
      %v1192 = vmul.f32 %v529, 20.0
      %v1193 = vadd.f32 %v1191, %v1192
      %v1194 = vadd.f32 %v1193, %v218
      %v1195 = vmul.f32 %v1187, 10.0
      %v1196 = vadd.f32 %v1194, %v1195
      %v1197 = vld [vmem:[#allocation2] sm:$0x1]
      %vm1198 = vcmp.eq.s32.totalorder %v83, 0
      %v1199 = vsel %vm1198, %v1196, 0.0
      %vm1200 = vcmp.eq.s32.totalorder %v83, 1
      %v1201 = vsel %vm1200, %v184, %v1199
      %vm1202 = vcmp.eq.s32.totalorder %v83, 2
      %v1203 = vsel %vm1202, %v264, %v1201
      %vm1204 = vcmp.eq.s32.totalorder %v83, 3
      %v1205 = vsel %vm1204, %v359, %v1203
      %vm1206 = vcmp.eq.s32.totalorder %v83, 4
      %v1207 = vsel %vm1206, %v1190, %v1205
      %vm1208 = vcmp.eq.s32.totalorder %v83, 5
      %v1209 = vsel %vm1208, %v1192, %v1207
      %vm1210 = vcmp.eq.s32.totalorder %v83, 6
      %v1211 = vsel %vm1210, %v1192, %v1209
      %vm1212 = vcmp.eq.s32.totalorder %v83, 7
      %v1213 = vsel %vm1212, %v1195, %v1211
      %vm1214 = vcmp.eq.s32.totalorder %v83, 8
      %v1216 = vlaneseq
      %v1217 = vshrl.u32 %v1216, 7
      %v1218 = vsub.s32 0, %v1217
      %v1219 = vrot.slane %v1197, %v1218
      %1220 = vset.pattern.permute.xlu0 0
      %1221 = vperm.xlu0 %1220, %v1219
      %v1222 = vpop.permute.xlu0 %1221
      %v1224 = vsel %vm1214, %v1222, %v1213
      %1225 = vst [vmem:[#allocation8] sm:$0xff] %v1224
    $region33: #{tpu_custom_call.1} parent=1 // pred_fallthru
      _
    // Predicated region
    $region34: #{tpu_custom_call.1} parent=1 // pred_check
      _
    $region35: #{tpu_custom_call.1} parent=1 // pred_check_branch
      %1227 = sbr.rel (0) target = $region37
    $region36: #{tpu_custom_call.1} parent=1 // pred_region
      %s1229 = ssub.s32 128, 128
      %1230 = vsyncadd [#allocation5], %s1229
      %s1232 = sshll.u32 [#allocation8], 4
      %s1233 = int_to_ptr.vmem [resolvable:$true] %s1232
      %1235 = dma.vmem_to_hbm [thread:$0]  %s1233, 128, %s3, [#allocation5]
    $region37: #{tpu_custom_call.1} parent=1 // pred_fallthru
      _
    // Predicated region
    $region38: #{tpu_custom_call.1} parent=1 // pred_check
      _
    $region39: #{tpu_custom_call.1} parent=1 // pred_check_branch
      %1237 = sbr.rel (0) target = $region41
    $region40: #{tpu_custom_call.1} parent=1 // pred_region
      %1238 = dma.done [#allocation5], 128
    $region41: #{tpu_custom_call.1} parent=1 // pred_fallthru
      _
    %1239 = vsyncpa [#allocation4], 1
    %1240 = vsyncpa [#allocation7], 1
    %1241 = vsyncpa [#allocation5], 1

</llo_original>
